<compile_context>
chip_gen: v7x
topology: tpu7x:2x2x1
jax: 0.10.0
libtpu: 0.0.40
codegen_flags: <defaults>
</compile_context>

<pallas_src>
import functools

import jax
import jax.numpy as jnp
import numpy as np
from jax.experimental import pallas as pl
from jax.experimental.pallas import tpu as pltpu


def _conv_bn_stats_kernel(x_ref, w_ref, y_ref, stats_ref, *, oh, ow, kh, kw, c_pad):
    """Fused im2col + matmul + BN partial-stats epilogue for one image.

    x_ref:    (Hp, Wp, C_in)  bf16 padded NHWC image (whole image in VMEM).
    w_ref:    (K, C_pad)      bf16 weight, K = KH*KW*C_in ordered (kh, kw, cin).
    y_ref:    (OH*OW, C_pad)  f32 conv output rows for this image.
    stats_ref:(8, C_pad)      f32; row 0 = per-channel sum, row 1 = sum of squares.
    """
    # Build im2col patches in VMEM from static shifted views (no HBM traffic).
    cols = []
    for i_kh in range(kh):
        for i_kw in range(kw):
            tap = x_ref[i_kh:i_kh + oh, i_kw:i_kw + ow, :].astype(jnp.float32)
            cols.append(tap.reshape(oh * ow, -1))          # (OH*OW, C_in)
    patches = jnp.concatenate(cols, axis=1).astype(jnp.bfloat16)   # (OH*OW, K)

    # Single MXU matmul, f32 accumulation, lane-dense (C_pad >= 128) output.
    y = jnp.dot(patches, w_ref[...], preferred_element_type=jnp.float32)
    y_ref[...] = y

    # BN statistics epilogue: per-channel partial sum / sum-of-squares.
    ysum = jnp.sum(y, axis=0, keepdims=True)               # (1, C_pad)
    ysq = jnp.sum(y * y, axis=0, keepdims=True)            # (1, C_pad)
    stats_ref[...] = jnp.concatenate(
        [ysum, ysq, jnp.zeros((6, c_pad), jnp.float32)], axis=0)


def _bn_relu_kernel(y_ref, scale_ref, shift_ref, o_ref, *, c_out):
    """Apply folded BatchNorm (y*scale + shift) and ReLU on one M-tile."""
    y = y_ref[...]                                          # (OH*OW, C_pad) f32
    z = jnp.maximum(y * scale_ref[...] + shift_ref[...], 0.0)
    o_ref[...] = z[:, :c_out]                               # drop the zero-padded channels


def basic_conv2d(x, weight, gamma, beta, *, padding=1, eps=1e-3):
    """Forward of BasicConv2d. x: (N, C_in, H, W); weight: (C_out, C_in, KH, KW)."""
    n, c_in, h, w = x.shape
    c_out, _, kh, kw = weight.shape
    oh = h + 2 * padding - kh + 1
    ow = w + 2 * padding - kw + 1
    k = kh * kw * c_in
    c_pad = ((c_out + 127) // 128) * 128                    # lane-dense output width
    m = n * oh * ow
    hp, wp = h + 2 * padding, w + 2 * padding

    # NCHW -> NHWC + spatial halo padding, bf16 for the MXU (halves HBM traffic).
    xp = jnp.pad(x.transpose(0, 2, 3, 1),
                 ((0, 0), (padding, padding), (padding, padding), (0, 0)))
    xp = xp.astype(jnp.bfloat16)

    # (C_out, C_in, KH, KW) -> (KH, KW, C_in, C_out) -> (K, C_pad), zero-padded cols.
    w2d = weight.transpose(2, 3, 1, 0).reshape(k, c_out)
    w2d = jnp.pad(w2d, ((0, 0), (0, c_pad - c_out))).astype(jnp.bfloat16)

    conv_kernel = functools.partial(_conv_bn_stats_kernel,
                                    oh=oh, ow=ow, kh=kh, kw=kw, c_pad=c_pad)

    # Pass 1: fused im2col + conv matmul + BN partial statistics.
    y, stats = pl.pallas_call(
        conv_kernel,
        out_shape=(jax.ShapeDtypeStruct((m, c_pad), jnp.float32),
                   jax.ShapeDtypeStruct((n * 8, c_pad), jnp.float32)),
        grid=(n,),
        in_specs=[
            pl.BlockSpec((None, hp, wp, c_in), lambda i: (i, 0, 0, 0)),
            pl.BlockSpec((k, c_pad), lambda i: (0, 0)),
        ],
        out_specs=(
            pl.BlockSpec((oh * ow, c_pad), lambda i: (i, 0)),
            pl.BlockSpec((8, c_pad), lambda i: (i, 0)),
        ),
        compiler_params=pltpu.CompilerParams(
            dimension_semantics=("parallel",),
            vmem_limit_bytes=32 * 1024 * 1024),
    )(xp, w2d)

    # Tiny per-channel math in JAX: reduce the per-step partials and fold
    # batch mean / biased variance with gamma/beta into scale/shift.
    stats = stats.reshape(n, 8, c_pad)
    tot = jnp.sum(stats[:, 0, :], axis=0)
    tot_sq = jnp.sum(stats[:, 1, :], axis=0)
    mean = tot / m
    var = jnp.maximum(tot_sq / m - mean * mean, 0.0)        # biased variance
    gamma_p = jnp.pad(gamma.astype(jnp.float32), (0, c_pad - c_out))
    beta_p = jnp.pad(beta.astype(jnp.float32), (0, c_pad - c_out))
    inv = jax.lax.rsqrt(var + eps)
    scale = (gamma_p * inv).reshape(1, c_pad)
    shift = (beta_p - mean * gamma_p * inv).reshape(1, c_pad)

    # Pass 2: tiled BN-apply + ReLU (reads y exactly once).
    out = pl.pallas_call(
        functools.partial(_bn_relu_kernel, c_out=c_out),
        out_shape=jax.ShapeDtypeStruct((m, c_out), jnp.float32),
        grid=(n,),
        in_specs=[
            pl.BlockSpec((oh * ow, c_pad), lambda i: (i, 0)),
            pl.BlockSpec((1, c_pad), lambda i: (0, 0)),
            pl.BlockSpec((1, c_pad), lambda i: (0, 0)),
        ],
        out_specs=pl.BlockSpec((oh * ow, c_out), lambda i: (i, 0)),
        compiler_params=pltpu.CompilerParams(
            dimension_semantics=("parallel",),
            vmem_limit_bytes=32 * 1024 * 1024),
    )(y, scale, shift)

    # Back to PyTorch NCHW (small final layout change, done once in XLA).
    return out.reshape(n, oh, ow, c_out).transpose(0, 3, 1, 2)


if __name__ == "__main__":
    key = jax.random.PRNGKey(0)
    kx, kwgt = jax.random.split(key)

    # BasicConv2d(in_channels=4, out_channels=8, kernel_size=3, padding=1)
    N, C_in, H, W = 2, 4, 16, 16
    C_out, KH, KW = 8, 3, 3

    x = jax.random.normal(kx, (N, C_in, H, W), jnp.float32)

    # Deterministic Conv2d-style weight init (kaiming-uniform bound), no bias.
    fan_in = C_in * KH * KW
    bound = 1.0 / np.sqrt(fan_in)
    weight = jax.random.uniform(kwgt, (C_out, C_in, KH, KW), jnp.float32,
                                -bound, bound)
    gamma = jnp.ones((C_out,), jnp.float32)    # BatchNorm2d default weight
    beta = jnp.zeros((C_out,), jnp.float32)    # BatchNorm2d default bias

    out = basic_conv2d(x, weight, gamma, beta, padding=1, eps=1e-3)
    out = jax.block_until_ready(out)
    assert out.shape == (N, C_out, H, W)

    # Pure-JAX reference (conv -> batch-stat BN -> relu).
    def ref_forward(xr, wr):
        conv = jax.lax.conv_general_dilated(
            xr, wr, (1, 1), ((1, 1), (1, 1)),
            dimension_numbers=("NCHW", "OIHW", "NCHW"),
            precision=jax.lax.Precision.HIGHEST)
        mu = conv.mean(axis=(0, 2, 3), keepdims=True)
        va = conv.var(axis=(0, 2, 3), keepdims=True)
        return jnp.maximum(
            (conv - mu) / jnp.sqrt(va + 1e-3)
            * gamma.reshape(1, -1, 1, 1) + beta.reshape(1, -1, 1, 1), 0.0)

    # Tight check: reference fed the same bf16-quantized inputs the kernel uses.
    ref_q = ref_forward(x.astype(jnp.bfloat16).astype(jnp.float32),
                        weight.astype(jnp.bfloat16).astype(jnp.float32))
    np.testing.assert_allclose(np.asarray(out), np.asarray(ref_q),
                               rtol=2e-3, atol=2e-3)
    # Loose check: full-f32 module semantics (bf16 matmul quantization error only).
    ref_f = ref_forward(x, weight)
    np.testing.assert_allclose(np.asarray(out), np.asarray(ref_f),
                               rtol=5e-2, atol=5e-2)

    print("KERNEL_OK")
</pallas_src>

<mosaic_0001>
module attributes {stable_mosaic.version = 11 : i64} {
  func.func @_conv_bn_stats_kernel(%arg0: i32, %arg1: memref<1x18x18x4xbf16, #tpu.memory_space<vmem>>, %arg2: memref<36x128xbf16, #tpu.memory_space<vmem>>, %arg3: memref<256x128xf32, #tpu.memory_space<vmem>>, %arg4: memref<8x128xf32, #tpu.memory_space<vmem>>) attributes {dimension_semantics = [#tpu.dimension_semantics<parallel>], iteration_bounds = array<i64: 2>, scalar_prefetch = 0 : i64, scratch_operands = 0 : i64, tpu.core_type = #tpu.core_type<tc>, window_params = [{transform_indices = @transform_0, window_bounds = array<i64: 1, 18, 18, 4>}, {pipeline_mode = #tpu.pipeline_mode<synchronous>, transform_indices = @transform_1, window_bounds = array<i64: 36, 128>}, {transform_indices = @transform_2, window_bounds = array<i64: 256, 128>}, {transform_indices = @transform_3, window_bounds = array<i64: 8, 128>}]} {
    %c0 = arith.constant 0 : index
    %c0_0 = arith.constant 0 : index
    %c0_1 = arith.constant 0 : index
    %c0_2 = arith.constant 0 : index
    %0 = vector.load %arg1[%c0, %c0_0, %c0_1, %c0_2] : memref<1x18x18x4xbf16, #tpu.memory_space<vmem>>, vector<1x16x16x4xbf16>
    %1 = vector.shape_cast %0 : vector<1x16x16x4xbf16> to vector<16x16x4xbf16>
    %2 = arith.extf %1 : vector<16x16x4xbf16> to vector<16x16x4xf32>
    %3 = vector.shape_cast %2 : vector<16x16x4xf32> to vector<256x4xf32>
    %c0_3 = arith.constant 0 : index
    %c0_4 = arith.constant 0 : index
    %c1 = arith.constant 1 : index
    %c0_5 = arith.constant 0 : index
    %4 = vector.load %arg1[%c0_3, %c0_4, %c1, %c0_5] : memref<1x18x18x4xbf16, #tpu.memory_space<vmem>>, vector<1x16x16x4xbf16>
    %5 = vector.shape_cast %4 : vector<1x16x16x4xbf16> to vector<16x16x4xbf16>
    %6 = arith.extf %5 : vector<16x16x4xbf16> to vector<16x16x4xf32>
    %7 = vector.shape_cast %6 : vector<16x16x4xf32> to vector<256x4xf32>
    %c0_6 = arith.constant 0 : index
    %c0_7 = arith.constant 0 : index
    %c2 = arith.constant 2 : index
    %c0_8 = arith.constant 0 : index
    %8 = vector.load %arg1[%c0_6, %c0_7, %c2, %c0_8] : memref<1x18x18x4xbf16, #tpu.memory_space<vmem>>, vector<1x16x16x4xbf16>
    %9 = vector.shape_cast %8 : vector<1x16x16x4xbf16> to vector<16x16x4xbf16>
    %10 = arith.extf %9 : vector<16x16x4xbf16> to vector<16x16x4xf32>
    %11 = vector.shape_cast %10 : vector<16x16x4xf32> to vector<256x4xf32>
    %c0_9 = arith.constant 0 : index
    %c1_10 = arith.constant 1 : index
    %c0_11 = arith.constant 0 : index
    %c0_12 = arith.constant 0 : index
    %12 = vector.load %arg1[%c0_9, %c1_10, %c0_11, %c0_12] : memref<1x18x18x4xbf16, #tpu.memory_space<vmem>>, vector<1x16x16x4xbf16>
    %13 = vector.shape_cast %12 : vector<1x16x16x4xbf16> to vector<16x16x4xbf16>
    %14 = arith.extf %13 : vector<16x16x4xbf16> to vector<16x16x4xf32>
    %15 = vector.shape_cast %14 : vector<16x16x4xf32> to vector<256x4xf32>
    %c0_13 = arith.constant 0 : index
    %c1_14 = arith.constant 1 : index
    %c1_15 = arith.constant 1 : index
    %c0_16 = arith.constant 0 : index
    %16 = vector.load %arg1[%c0_13, %c1_14, %c1_15, %c0_16] : memref<1x18x18x4xbf16, #tpu.memory_space<vmem>>, vector<1x16x16x4xbf16>
    %17 = vector.shape_cast %16 : vector<1x16x16x4xbf16> to vector<16x16x4xbf16>
    %18 = arith.extf %17 : vector<16x16x4xbf16> to vector<16x16x4xf32>
    %19 = vector.shape_cast %18 : vector<16x16x4xf32> to vector<256x4xf32>
    %c0_17 = arith.constant 0 : index
    %c1_18 = arith.constant 1 : index
    %c2_19 = arith.constant 2 : index
    %c0_20 = arith.constant 0 : index
    %20 = vector.load %arg1[%c0_17, %c1_18, %c2_19, %c0_20] : memref<1x18x18x4xbf16, #tpu.memory_space<vmem>>, vector<1x16x16x4xbf16>
    %21 = vector.shape_cast %20 : vector<1x16x16x4xbf16> to vector<16x16x4xbf16>
    %22 = arith.extf %21 : vector<16x16x4xbf16> to vector<16x16x4xf32>
    %23 = vector.shape_cast %22 : vector<16x16x4xf32> to vector<256x4xf32>
    %c0_21 = arith.constant 0 : index
    %c2_22 = arith.constant 2 : index
    %c0_23 = arith.constant 0 : index
    %c0_24 = arith.constant 0 : index
    %24 = vector.load %arg1[%c0_21, %c2_22, %c0_23, %c0_24] : memref<1x18x18x4xbf16, #tpu.memory_space<vmem>>, vector<1x16x16x4xbf16>
    %25 = vector.shape_cast %24 : vector<1x16x16x4xbf16> to vector<16x16x4xbf16>
    %26 = arith.extf %25 : vector<16x16x4xbf16> to vector<16x16x4xf32>
    %27 = vector.shape_cast %26 : vector<16x16x4xf32> to vector<256x4xf32>
    %c0_25 = arith.constant 0 : index
    %c2_26 = arith.constant 2 : index
    %c1_27 = arith.constant 1 : index
    %c0_28 = arith.constant 0 : index
    %28 = vector.load %arg1[%c0_25, %c2_26, %c1_27, %c0_28] : memref<1x18x18x4xbf16, #tpu.memory_space<vmem>>, vector<1x16x16x4xbf16>
    %29 = vector.shape_cast %28 : vector<1x16x16x4xbf16> to vector<16x16x4xbf16>
    %30 = arith.extf %29 : vector<16x16x4xbf16> to vector<16x16x4xf32>
    %31 = vector.shape_cast %30 : vector<16x16x4xf32> to vector<256x4xf32>
    %c0_29 = arith.constant 0 : index
    %c2_30 = arith.constant 2 : index
    %c2_31 = arith.constant 2 : index
    %c0_32 = arith.constant 0 : index
    %32 = vector.load %arg1[%c0_29, %c2_30, %c2_31, %c0_32] : memref<1x18x18x4xbf16, #tpu.memory_space<vmem>>, vector<1x16x16x4xbf16>
    %33 = vector.shape_cast %32 : vector<1x16x16x4xbf16> to vector<16x16x4xbf16>
    %34 = arith.extf %33 : vector<16x16x4xbf16> to vector<16x16x4xf32>
    %35 = vector.shape_cast %34 : vector<16x16x4xf32> to vector<256x4xf32>
    %36 = tpu.concatenate %3, %7, %11, %15, %19, %23, %27, %31, %35 in 1 : vector<256x4xf32>, vector<256x4xf32>, vector<256x4xf32>, vector<256x4xf32>, vector<256x4xf32>, vector<256x4xf32>, vector<256x4xf32>, vector<256x4xf32>, vector<256x4xf32> -> vector<256x36xf32>
    %37 = arith.truncf %36 : vector<256x36xf32> to vector<256x36xbf16>
    %c0_33 = arith.constant 0 : index
    %c0_34 = arith.constant 0 : index
    %38 = vector.load %arg2[%c0_33, %c0_34] : memref<36x128xbf16, #tpu.memory_space<vmem>>, vector<36x128xbf16>
    %cst = arith.constant dense<0.000000e+00> : vector<256x128xf32>
    %39 = tpu.matmul %37, %38, %cst {dimension_numbers = #tpu.dot_dimension_numbers<[1], [0], [0], [1], [0, 0, 1, 1], [], []>} : vector<256x36xbf16>, vector<36x128xbf16>, vector<256x128xf32> -> vector<256x128xf32>
    %c0_35 = arith.constant 0 : index
    %c0_36 = arith.constant 0 : index
    %40 = vector.load %arg3[%c0_35, %c0_36] : memref<256x128xf32, #tpu.memory_space<vmem>>, vector<256x128xf32>
    tpu.vector_store %arg3[%c0_35, %c0_36], %39 {strides = array<i32>} : memref<256x128xf32, #tpu.memory_space<vmem>>, vector<256x128xf32>,
    %cst_37 = arith.constant dense<0.000000e+00> : vector<128xf32>
    %41 = vector.multi_reduction <add>, %39, %cst_37 [0] : vector<256x128xf32> to vector<128xf32>
    %42 = vector.shape_cast %41 : vector<128xf32> to vector<1x128xf32>
    %43 = arith.mulf %39, %39 : vector<256x128xf32>
    %cst_38 = arith.constant dense<0.000000e+00> : vector<128xf32>
    %44 = vector.multi_reduction <add>, %43, %cst_38 [0] : vector<256x128xf32> to vector<128xf32>
    %45 = vector.shape_cast %44 : vector<128xf32> to vector<1x128xf32>
    %cst_39 = arith.constant 0.000000e+00 : f32
    %46 = vector.broadcast %cst_39 : f32 to vector<6x128xf32>
    %47 = tpu.concatenate %42, %45, %46 in 0 : vector<1x128xf32>, vector<1x128xf32>, vector<6x128xf32> -> vector<8x128xf32>
    %c0_40 = arith.constant 0 : index
    %c0_41 = arith.constant 0 : index
    %48 = vector.load %arg4[%c0_40, %c0_41] : memref<8x128xf32, #tpu.memory_space<vmem>>, vector<8x128xf32>
    tpu.vector_store %arg4[%c0_40, %c0_41], %47 {strides = array<i32>} : memref<8x128xf32, #tpu.memory_space<vmem>>, vector<8x128xf32>,
    return
  }
  func.func @transform_0(%arg0: i32) -> (i32, i32, i32, i32) {
    %c0_i32 = arith.constant 0 : i32
    %c0_i32_0 = arith.constant 0 : i32
    %c0_i32_1 = arith.constant 0 : i32
    %c0_i32_2 = arith.constant 0 : i32
    return %arg0, %c0_i32, %c0_i32_0, %c0_i32_1 : i32, i32, i32, i32
  }
  func.func @transform_1(%arg0: i32) -> (i32, i32) {
    %c0_i32 = arith.constant 0 : i32
    %c0_i32_0 = arith.constant 0 : i32
    %c0_i32_1 = arith.constant 0 : i32
    return %c0_i32, %c0_i32_0 : i32, i32
  }
  func.func @transform_2(%arg0: i32) -> (i32, i32) {
    %c0_i32 = arith.constant 0 : i32
    %c0_i32_0 = arith.constant 0 : i32
    return %arg0, %c0_i32 : i32, i32
  }
  func.func @transform_3(%arg0: i32) -> (i32, i32) {
    %c0_i32 = arith.constant 0 : i32
    %c0_i32_0 = arith.constant 0 : i32
    return %arg0, %c0_i32 : i32, i32
  }
}

</mosaic_0001>

<llo_original>
// kernel: tpu_custom_call.1
$region0: #{tpu_custom_call.1}
  #allocation0 [shape = 'u32[]', space=smem, size = 0x4, offset = 0x4, fixed_abs, tag = 'smem constant byte address 0x4 - core index']
  #allocation1 [shape = 'u32[144,128]{1,0:T(1,128)}', space=vmem, size = 0x12000, scoped, tag = 'internal scratch']
  %s0 = inlined_call_operand.vmem [shape: bf16[2,18,18,4], index: 0, kind: input, shape index: {}]
  %s1 = inlined_call_operand.vmem [shape: bf16[36,128], index: 1, kind: input, shape index: {}]
  %s2 = inlined_call_operand.hbm [shape: f32[512,128], index: 2, kind: output, shape index: {0}]
  %s3 = inlined_call_operand.hbm [shape: f32[16,128], index: 3, kind: output, shape index: {1}]
  %4 = xla_tuple %s2, %s3
  %s5 = sld [smem:[#allocation0]]
  $region49: #{tpu_custom_call.1} parent=0
    _
  %s7 = ssub.s32 1, %s5
  %s8 = scalar_select 0, %s7, %s5
  $region1: #{tpu_custom_call.1} parent=0
    #allocation2 [shape = 'u8[262144]{0}', space=vmem, size = 0x40000, scoped, tag = 'output window, operand 0']
    #allocation3 [shape = 's32[2]{0}', space=sflag, size = 0x8, scoped, tag = 'scoped memory for tpu_custom_call.1']
    #allocation4 [shape = 'u8[8192]{0}', space=vmem, size = 0x2000, scoped, tag = 'output window, operand 1']
    #allocation5 [shape = 's32[2]{0}', space=sflag, size = 0x8, scoped, tag = 'scoped memory for tpu_custom_call.1']
    %9 = vsyncpa [#allocation3], 0
    %s10 = scalar_lea.sflag [#allocation3], 1
    %11 = vsyncpa %s10, 0
    %12 = vsyncpa [#allocation5], 0
    %s13 = scalar_lea.sflag [#allocation5], 1
    %14 = vsyncpa %s13, 0
    loop: start=0, step=1, limit=4
    $region2: #{tpu_custom_call.1} parent=1 // loop_pre_header
      _
    $region3: #{tpu_custom_call.1} parent=1 // loop_header
      %s16 = sphi 0, %s20
      %p17 = scmp.ge.s32.totalorder %s16, 4
      %s26 = sphi 0, %s28
      %s29 = sphi 0, %s26
      %s30 = sphi 0, %s29
      %s46 = sphi 0, %s30
      %s50 = sphi 0, %s50
      %s52 = sphi 0, %s50
      %s53 = sphi 0, %s52
      %s67 = sphi 0, %s53
      %s73 = sphi 0, %s75
      %s76 = sphi 0, %s73
      %s77 = sphi 0, %s76
      %s93 = sphi 0, %s77
      %s99 = sphi 0, %s101
      %s102 = sphi 0, %s99
      %s103 = sphi 0, %s102
      %s119 = sphi 0, %s103
    $region4: #{tpu_custom_call.1} parent=1 // loop_header_branch
      %19 = sbr.rel (%p17) target = $region8
    $region5: #{tpu_custom_call.1} parent=1 // loop_body
      %s21 = ssub.s32 %s16, 1
      %s22 = ssub.s32 %s16, 2
      %s23 = sadd.s32 %s16, 1
      %s24 = ssub.s32 %s16, %s23
      %p25 = scmp.eq.s32.totalorder %s24, 0
      %s27 = sadd.s32 %s26, 1
      %s28 = scalar_select %p25, %s26, %s27
      %p31 = pneg %p25
      %p32 = scmp.eq.s32.totalorder %s16, 1
      %p33 = por %p31, %p32
      %p34 = scmp.ne.s32.totalorder %s26, %s29
      %p35 = scmp.eq.s32.totalorder %s16, 0
      %p36 = por %p34, %p35
      %p37 = scmp.ne.s32.totalorder %s26, %s29
      %p38 = scmp.eq.s32.totalorder %s21, 1
      %p39 = por %p37, %p38
      %p40 = scmp.ne.s32.totalorder %s29, %s30
      %p41 = scmp.eq.s32.totalorder %s21, 0
      %p42 = por %p40, %p41
      %p43 = scmp.ne.s32.totalorder %s29, %s30
      %p44 = scmp.eq.s32.totalorder %s22, 1
      %p45 = por %p43, %p44
      %p47 = scmp.ne.s32.totalorder %s30, %s46
      %p48 = scmp.eq.s32.totalorder %s22, 0
      %p49 = por %p47, %p48
      %s51 = sadd.s32 %s50, 1
      %p54 = scmp.eq.s32.totalorder %s16, 1
      %p55 = scmp.ne.s32.totalorder %s50, %s52
      %p56 = scmp.eq.s32.totalorder %s16, 0
      %p57 = por %p55, %p56
      %p58 = scmp.ne.s32.totalorder %s50, %s52
      %p59 = scmp.eq.s32.totalorder %s21, 1
      %p60 = por %p58, %p59
      %p61 = scmp.ne.s32.totalorder %s52, %s53
      %p62 = scmp.eq.s32.totalorder %s21, 0
      %p63 = por %p61, %p62
      %p64 = scmp.ne.s32.totalorder %s52, %s53
      %p65 = scmp.eq.s32.totalorder %s22, 1
      %p66 = por %p64, %p65
      %p68 = scmp.ne.s32.totalorder %s53, %s67
      %p69 = scmp.eq.s32.totalorder %s22, 0
      %p70 = por %p68, %p69
      %s71 = ssub.s32 %s16, %s23
      %p72 = scmp.eq.s32.totalorder %s71, 0
      %s74 = sadd.s32 %s73, 1
      %s75 = scalar_select %p72, %s73, %s74
      %p78 = pneg %p72
      %p79 = scmp.eq.s32.totalorder %s16, 1
      %p80 = por %p78, %p79
      %p81 = scmp.ne.s32.totalorder %s73, %s76
      %p82 = scmp.eq.s32.totalorder %s16, 0
      %p83 = por %p81, %p82
      %p84 = scmp.ne.s32.totalorder %s73, %s76
      %p85 = scmp.eq.s32.totalorder %s21, 1
      %p86 = por %p84, %p85
      %p87 = scmp.ne.s32.totalorder %s76, %s77
      %p88 = scmp.eq.s32.totalorder %s21, 0
      %p89 = por %p87, %p88
      %p90 = scmp.ne.s32.totalorder %s76, %s77
      %p91 = scmp.eq.s32.totalorder %s22, 1
      %p92 = por %p90, %p91
      %p94 = scmp.ne.s32.totalorder %s77, %s93
      %p95 = scmp.eq.s32.totalorder %s22, 0
      %p96 = por %p94, %p95
      %s97 = ssub.s32 %s16, %s23
      %p98 = scmp.eq.s32.totalorder %s97, 0
      %s100 = sadd.s32 %s99, 1
      %s101 = scalar_select %p98, %s99, %s100
      %p104 = pneg %p98
      %p105 = scmp.eq.s32.totalorder %s16, 1
      %p106 = por %p104, %p105
      %p107 = scmp.ne.s32.totalorder %s99, %s102
      %p108 = scmp.eq.s32.totalorder %s16, 0
      %p109 = por %p107, %p108
      %p110 = scmp.ne.s32.totalorder %s99, %s102
      %p111 = scmp.eq.s32.totalorder %s21, 1
      %p112 = por %p110, %p111
      %p113 = scmp.ne.s32.totalorder %s102, %s103
      %p114 = scmp.eq.s32.totalorder %s21, 0
      %p115 = por %p113, %p114
      %p116 = scmp.ne.s32.totalorder %s102, %s103
      %p117 = scmp.eq.s32.totalorder %s22, 1
      %p118 = por %p116, %p117
      %p120 = scmp.ne.s32.totalorder %s103, %s119
      %p121 = scmp.eq.s32.totalorder %s22, 0
      %p122 = por %p120, %p121
      %p123 = scmp.le.s32.totalorder 1, %s16
      %p124 = scmp.lt.s32.totalorder %s16, 3
      %p125 = pnand %p123, %p124
      %p126 = pneg %p125
      // Predicated region
      $region9: #{tpu_custom_call.1} parent=5 // pred_check
        _
      $region10: #{tpu_custom_call.1} parent=5 // pred_check_branch
        %128 = sbr.rel (%p125) target = $region12
      $region11: #{tpu_custom_call.1} parent=5 // pred_region
        %s129 = ssub.s32 %s16, 1
        // Predicated region
        $region13: #{tpu_custom_call.1} parent=11 // pred_check
          %p130 = pneg %p63
        $region14: #{tpu_custom_call.1} parent=11 // pred_check_branch
          %132 = sbr.rel (%p130) target = $region16
        $region15: #{tpu_custom_call.1} parent=11 // pred_region
          _
        $region16: #{tpu_custom_call.1} parent=11 // pred_fallthru
          _
      $region12: #{tpu_custom_call.1} parent=5 // pred_fallthru
        _
      %p133 = scmp.lt.s32.totalorder %s16, 2
      // Predicated region
      $region17: #{tpu_custom_call.1} parent=5 // pred_check
        %p134 = pneg %p133
      $region18: #{tpu_custom_call.1} parent=5 // pred_check_branch
        %136 = sbr.rel (%p134) target = $region20
      $region19: #{tpu_custom_call.1} parent=5 // pred_region
        // Predicated region
        $region21: #{tpu_custom_call.1} parent=19 // pred_check
          %p137 = pneg %p36
        $region22: #{tpu_custom_call.1} parent=19 // pred_check_branch
          %139 = sbr.rel (%p137) target = $region24
        $region23: #{tpu_custom_call.1} parent=19 // pred_region
          %p140 = scmp.lt.s32.totalorder %s16, 1
          %s141 = scalar_select %p140, %s16, 1
          %s142 = smul.addr %s141, 54
          %s143 = smul.addr %s142, 4
          %s144 = scalar_lea.vmem %s0, %s143
        $region24: #{tpu_custom_call.1} parent=19 // pred_fallthru
          _
      $region20: #{tpu_custom_call.1} parent=5 // pred_fallthru
        _
      %p145 = scmp.le.s32.totalorder 1, %s16
      %p146 = scmp.lt.s32.totalorder %s16, 3
      %p147 = pnand %p145, %p146
      %p148 = pneg %p147
      // Predicated region
      $region25: #{tpu_custom_call.1} parent=5 // pred_check
        _
      $region26: #{tpu_custom_call.1} parent=5 // pred_check_branch
        %150 = sbr.rel (%p147) target = $region28
      $region27: #{tpu_custom_call.1} parent=5 // pred_region
        %s151 = ssub.s32 %s16, 1
        %p152 = scmp.lt.s32.totalorder %s21, 1
        %s153 = scalar_select %p152, %s21, 1
        %s154 = smul.addr %s153, 54
        %s155 = smul.addr %s154, 4
        %s156 = scalar_lea.vmem %s0, %s155
        %p157 = pneg %p42
        %p158 = pneg %p39
        %p159 = pneg %p63
        %p160 = pneg %p60
        %p161 = pneg %p89
        %p162 = pneg %p86
        %s163 = sand.u32 %s76, 1
        %s164 = scalar_lea.sflag [#allocation3], %s163
        %s165 = sand.u32 %s76, 1
        %s166 = smul.addr %s165, 256
        %s167 = scalar_lea.vmem [#allocation2], %s166
        %p168 = pneg %p115
        %p169 = pneg %p112
        %s170 = sand.u32 %s102, 1
        %s171 = scalar_lea.sflag [#allocation5], %s170
        %s172 = sand.u32 %s102, 1
        %s173 = smul.addr %s172, 8
        %s174 = scalar_lea.vmem [#allocation4], %s173
        %p175 = scmp.lt.s32.totalorder %s21, 1
        %s176 = scalar_select %p175, %s21, 1
        %s177 = smul.addr %s176, 54
        %s178 = smul.addr %s177, 4
        %s179 = scalar_lea.vmem %s0, %s178
        %s180 = smul.u32 32, %s21
        %v182 = vld [vmem:[%s179] sm:$0xf]
        %v183 = vld [vmem:[%s179 + $0x4] sm:$0xf]
        %v184 = vld [vmem:[%s179 + $0xc] sm:$0xf]
        %v185 = vld [vmem:[%s179 + $0x10] sm:$0xf]
        %v186 = vld [vmem:[%s179 + $0x18] sm:$0xf]
        %v187 = vld [vmem:[%s179 + $0x1c] sm:$0xf]
        %v188 = vld [vmem:[%s179 + $0x24] sm:$0xf]
        %v189 = vld [vmem:[%s179 + $0x28] sm:$0xf]
        %v190 = vld [vmem:[%s179 + $0x30] sm:$0xf]
        %v191 = vld [vmem:[%s179 + $0x34] sm:$0xf]
        %v192 = vld [vmem:[%s179 + $0x3c] sm:$0xf]
        %v193 = vld [vmem:[%s179 + $0x40] sm:$0xf]
        %v194 = vld [vmem:[%s179 + $0x48] sm:$0xf]
        %v195 = vld [vmem:[%s179 + $0x4c] sm:$0xf]
        %v196 = vld [vmem:[%s179 + $0x54] sm:$0xf]
        %v197 = vld [vmem:[%s179 + $0x58] sm:$0xf]
        %v198 = vld [vmem:[%s179 + $0x60] sm:$0xf]
        %v199 = vld [vmem:[%s179 + $0x64] sm:$0xf]
        %v200 = vld [vmem:[%s179 + $0x6c] sm:$0xf]
        %v201 = vld [vmem:[%s179 + $0x70] sm:$0xf]
        %v202 = vld [vmem:[%s179 + $0x78] sm:$0xf]
        %v203 = vld [vmem:[%s179 + $0x7c] sm:$0xf]
        %v204 = vld [vmem:[%s179 + $0x84] sm:$0xf]
        %v205 = vld [vmem:[%s179 + $0x88] sm:$0xf]
        %v206 = vld [vmem:[%s179 + $0x90] sm:$0xf]
        %v207 = vld [vmem:[%s179 + $0x94] sm:$0xf]
        %v208 = vld [vmem:[%s179 + $0x9c] sm:$0xf]
        %v209 = vld [vmem:[%s179 + $0xa0] sm:$0xf]
        %v210 = vld [vmem:[%s179 + $0xa8] sm:$0xf]
        %v211 = vld [vmem:[%s179 + $0xac] sm:$0xf]
        %v212 = vld [vmem:[%s179 + $0xb4] sm:$0xf]
        %v213 = vld [vmem:[%s179 + $0xb8] sm:$0xf]
        %v214 = vunpack.c.l.bf16 %v182
        %v215 = vunpack.c.l.bf16 %v183
        %v216 = vunpack.c.l.bf16 %v184
        %v217 = vunpack.c.l.bf16 %v185
        %v218 = vunpack.c.l.bf16 %v186
        %v219 = vunpack.c.l.bf16 %v187
        %v220 = vunpack.c.l.bf16 %v188
        %v221 = vunpack.c.l.bf16 %v189
        %v222 = vunpack.c.l.bf16 %v190
        %v223 = vunpack.c.l.bf16 %v191
        %v224 = vunpack.c.l.bf16 %v192
        %v225 = vunpack.c.l.bf16 %v193
        %v226 = vunpack.c.l.bf16 %v194
        %v227 = vunpack.c.l.bf16 %v195
        %v228 = vunpack.c.l.bf16 %v196
        %v229 = vunpack.c.l.bf16 %v197
        %v230 = vunpack.c.l.bf16 %v198
        %v231 = vunpack.c.l.bf16 %v199
        %v232 = vunpack.c.l.bf16 %v200
        %v233 = vunpack.c.l.bf16 %v201
        %v234 = vunpack.c.l.bf16 %v202
        %v235 = vunpack.c.l.bf16 %v203
        %v236 = vunpack.c.l.bf16 %v204
        %v237 = vunpack.c.l.bf16 %v205
        %v238 = vunpack.c.l.bf16 %v206
        %v239 = vunpack.c.l.bf16 %v207
        %v240 = vunpack.c.l.bf16 %v208
        %v241 = vunpack.c.l.bf16 %v209
        %v242 = vunpack.c.l.bf16 %v210
        %v243 = vunpack.c.l.bf16 %v211
        %v244 = vunpack.c.l.bf16 %v212
        %v245 = vunpack.c.l.bf16 %v213
        %v246 = vld [vmem:[%s179 + $0x8] sm:$0x1]
        %v247 = vld [vmem:[%s179 + $0x14] sm:$0x1]
        %v248 = vld [vmem:[%s179 + $0x20] sm:$0x1]
        %v249 = vld [vmem:[%s179 + $0x2c] sm:$0x1]
        %v250 = vld [vmem:[%s179 + $0x38] sm:$0x1]
        %v251 = vld [vmem:[%s179 + $0x44] sm:$0x1]
        %v252 = vld [vmem:[%s179 + $0x50] sm:$0x1]
        %v253 = vld [vmem:[%s179 + $0x5c] sm:$0x1]
        %v254 = vld [vmem:[%s179 + $0x68] sm:$0x1]
        %v255 = vld [vmem:[%s179 + $0x74] sm:$0x1]
        %v256 = vld [vmem:[%s179 + $0x80] sm:$0x1]
        %v257 = vld [vmem:[%s179 + $0x8c] sm:$0x1]
        %v258 = vld [vmem:[%s179 + $0x98] sm:$0x1]
        %v259 = vld [vmem:[%s179 + $0xa4] sm:$0x1]
        %v260 = vld [vmem:[%s179 + $0xb0] sm:$0x1]
        %v261 = vld [vmem:[%s179 + $0xbc] sm:$0x1]
        %v262 = vunpack.c.l.bf16 %v246
        %v263 = vunpack.c.l.bf16 %v247
        %v264 = vunpack.c.l.bf16 %v248
        %v265 = vunpack.c.l.bf16 %v249
        %v266 = vunpack.c.l.bf16 %v250
        %v267 = vunpack.c.l.bf16 %v251
        %v268 = vunpack.c.l.bf16 %v252
        %v269 = vunpack.c.l.bf16 %v253
        %v270 = vunpack.c.l.bf16 %v254
        %v271 = vunpack.c.l.bf16 %v255
        %v272 = vunpack.c.l.bf16 %v256
        %v273 = vunpack.c.l.bf16 %v257
        %v274 = vunpack.c.l.bf16 %v258
        %v275 = vunpack.c.l.bf16 %v259
        %v276 = vunpack.c.l.bf16 %v260
        %v277 = vunpack.c.l.bf16 %v261
        %vm326 = vcmask 1046528
        %v327 = vrot.slane %v214, 1
        %v328 = vrot.slane %v215, 1
        %v329 = vsel %vm326, %v327, %v328
        %v330 = vrot.slane %v262, 1
        %v331 = vsel %vm326, %v328, %v330
        %v332 = vrot.slane %v216, 1
        %v333 = vrot.slane %v217, 1
        %v334 = vsel %vm326, %v332, %v333
        %v335 = vrot.slane %v263, 1
        %v336 = vsel %vm326, %v333, %v335
        %v337 = vrot.slane %v218, 1
        %v338 = vrot.slane %v219, 1
        %v339 = vsel %vm326, %v337, %v338
        %v340 = vrot.slane %v264, 1
        %v341 = vsel %vm326, %v338, %v340
        %v342 = vrot.slane %v220, 1
        %v343 = vrot.slane %v221, 1
        %v344 = vsel %vm326, %v342, %v343
        %v345 = vrot.slane %v265, 1
        %v346 = vsel %vm326, %v343, %v345
        %v347 = vrot.slane %v222, 1
        %v348 = vrot.slane %v223, 1
        %v349 = vsel %vm326, %v347, %v348
        %v350 = vrot.slane %v266, 1
        %v351 = vsel %vm326, %v348, %v350
        %v352 = vrot.slane %v224, 1
        %v353 = vrot.slane %v225, 1
        %v354 = vsel %vm326, %v352, %v353
        %v355 = vrot.slane %v267, 1
        %v356 = vsel %vm326, %v353, %v355
        %v357 = vrot.slane %v226, 1
        %v358 = vrot.slane %v227, 1
        %v359 = vsel %vm326, %v357, %v358
        %v360 = vrot.slane %v268, 1
        %v361 = vsel %vm326, %v358, %v360
        %v362 = vrot.slane %v228, 1
        %v363 = vrot.slane %v229, 1
        %v364 = vsel %vm326, %v362, %v363
        %v365 = vrot.slane %v269, 1
        %v366 = vsel %vm326, %v363, %v365
        %v367 = vrot.slane %v230, 1
        %v368 = vrot.slane %v231, 1
        %v369 = vsel %vm326, %v367, %v368
        %v370 = vrot.slane %v270, 1
        %v371 = vsel %vm326, %v368, %v370
        %v372 = vrot.slane %v232, 1
        %v373 = vrot.slane %v233, 1
        %v374 = vsel %vm326, %v372, %v373
        %v375 = vrot.slane %v271, 1
        %v376 = vsel %vm326, %v373, %v375
        %v377 = vrot.slane %v234, 1
        %v378 = vrot.slane %v235, 1
        %v379 = vsel %vm326, %v377, %v378
        %v380 = vrot.slane %v272, 1
        %v381 = vsel %vm326, %v378, %v380
        %v382 = vrot.slane %v236, 1
        %v383 = vrot.slane %v237, 1
        %v384 = vsel %vm326, %v382, %v383
        %v385 = vrot.slane %v273, 1
        %v386 = vsel %vm326, %v383, %v385
        %v387 = vrot.slane %v238, 1
        %v388 = vrot.slane %v239, 1
        %v389 = vsel %vm326, %v387, %v388
        %v390 = vrot.slane %v274, 1
        %v391 = vsel %vm326, %v388, %v390
        %v392 = vrot.slane %v240, 1
        %v393 = vrot.slane %v241, 1
        %v394 = vsel %vm326, %v392, %v393
        %v395 = vrot.slane %v275, 1
        %v396 = vsel %vm326, %v393, %v395
        %v397 = vrot.slane %v242, 1
        %v398 = vrot.slane %v243, 1
        %v399 = vsel %vm326, %v397, %v398
        %v400 = vrot.slane %v276, 1
        %v401 = vsel %vm326, %v398, %v400
        %v402 = vrot.slane %v244, 1
        %v403 = vrot.slane %v245, 1
        %v404 = vsel %vm326, %v402, %v403
        %v405 = vrot.slane %v277, 1
        %v406 = vsel %vm326, %v403, %v405
        %v407 = vld [vmem:[%s179] sm:$0xe]
        %v408 = vld [vmem:[%s179 + $0xc] sm:$0xe]
        %v409 = vld [vmem:[%s179 + $0x18] sm:$0xe]
        %v410 = vld [vmem:[%s179 + $0x24] sm:$0xe]
        %v411 = vld [vmem:[%s179 + $0x30] sm:$0xe]
        %v412 = vld [vmem:[%s179 + $0x3c] sm:$0xe]
        %v413 = vld [vmem:[%s179 + $0x48] sm:$0xe]
        %v414 = vld [vmem:[%s179 + $0x54] sm:$0xe]
        %v415 = vld [vmem:[%s179 + $0x60] sm:$0xe]
        %v416 = vld [vmem:[%s179 + $0x6c] sm:$0xe]
        %v417 = vld [vmem:[%s179 + $0x78] sm:$0xe]
        %v418 = vld [vmem:[%s179 + $0x84] sm:$0xe]
        %v419 = vld [vmem:[%s179 + $0x90] sm:$0xe]
        %v420 = vld [vmem:[%s179 + $0x9c] sm:$0xe]
        %v421 = vld [vmem:[%s179 + $0xa8] sm:$0xe]
        %v422 = vld [vmem:[%s179 + $0xb4] sm:$0xe]
        %v423 = vunpack.c.l.bf16 %v407
        %v424 = vunpack.c.l.bf16 %v408
        %v425 = vunpack.c.l.bf16 %v409
        %v426 = vunpack.c.l.bf16 %v410
        %v427 = vunpack.c.l.bf16 %v411
        %v428 = vunpack.c.l.bf16 %v412
        %v429 = vunpack.c.l.bf16 %v413
        %v430 = vunpack.c.l.bf16 %v414
        %v431 = vunpack.c.l.bf16 %v415
        %v432 = vunpack.c.l.bf16 %v416
        %v433 = vunpack.c.l.bf16 %v417
        %v434 = vunpack.c.l.bf16 %v418
        %v435 = vunpack.c.l.bf16 %v419
        %v436 = vunpack.c.l.bf16 %v420
        %v437 = vunpack.c.l.bf16 %v421
        %v438 = vunpack.c.l.bf16 %v422
        %vm455 = vcmask 1045504
        %v456 = vrot.slane %v423, 2
        %v457 = vrot.slane %v215, 2
        %v458 = vsel %vm455, %v456, %v457
        %v459 = vrot.slane %v262, 2
        %v460 = vsel %vm455, %v457, %v459
        %v461 = vrot.slane %v424, 2
        %v462 = vrot.slane %v217, 2
        %v463 = vsel %vm455, %v461, %v462
        %v464 = vrot.slane %v263, 2
        %v465 = vsel %vm455, %v462, %v464
        %v466 = vrot.slane %v425, 2
        %v467 = vrot.slane %v219, 2
        %v468 = vsel %vm455, %v466, %v467
        %v469 = vrot.slane %v264, 2
        %v470 = vsel %vm455, %v467, %v469
        %v471 = vrot.slane %v426, 2
        %v472 = vrot.slane %v221, 2
        %v473 = vsel %vm455, %v471, %v472
        %v474 = vrot.slane %v265, 2
        %v475 = vsel %vm455, %v472, %v474
        %v476 = vrot.slane %v427, 2
        %v477 = vrot.slane %v223, 2
        %v478 = vsel %vm455, %v476, %v477
        %v479 = vrot.slane %v266, 2
        %v480 = vsel %vm455, %v477, %v479
        %v481 = vrot.slane %v428, 2
        %v482 = vrot.slane %v225, 2
        %v483 = vsel %vm455, %v481, %v482
        %v484 = vrot.slane %v267, 2
        %v485 = vsel %vm455, %v482, %v484
        %v486 = vrot.slane %v429, 2
        %v487 = vrot.slane %v227, 2
        %v488 = vsel %vm455, %v486, %v487
        %v489 = vrot.slane %v268, 2
        %v490 = vsel %vm455, %v487, %v489
        %v491 = vrot.slane %v430, 2
        %v492 = vrot.slane %v229, 2
        %v493 = vsel %vm455, %v491, %v492
        %v494 = vrot.slane %v269, 2
        %v495 = vsel %vm455, %v492, %v494
        %v496 = vrot.slane %v431, 2
        %v497 = vrot.slane %v231, 2
        %v498 = vsel %vm455, %v496, %v497
        %v499 = vrot.slane %v270, 2
        %v500 = vsel %vm455, %v497, %v499
        %v501 = vrot.slane %v432, 2
        %v502 = vrot.slane %v233, 2
        %v503 = vsel %vm455, %v501, %v502
        %v504 = vrot.slane %v271, 2
        %v505 = vsel %vm455, %v502, %v504
        %v506 = vrot.slane %v433, 2
        %v507 = vrot.slane %v235, 2
        %v508 = vsel %vm455, %v506, %v507
        %v509 = vrot.slane %v272, 2
        %v510 = vsel %vm455, %v507, %v509
        %v511 = vrot.slane %v434, 2
        %v512 = vrot.slane %v237, 2
        %v513 = vsel %vm455, %v511, %v512
        %v514 = vrot.slane %v273, 2
        %v515 = vsel %vm455, %v512, %v514
        %v516 = vrot.slane %v435, 2
        %v517 = vrot.slane %v239, 2
        %v518 = vsel %vm455, %v516, %v517
        %v519 = vrot.slane %v274, 2
        %v520 = vsel %vm455, %v517, %v519
        %v521 = vrot.slane %v436, 2
        %v522 = vrot.slane %v241, 2
        %v523 = vsel %vm455, %v521, %v522
        %v524 = vrot.slane %v275, 2
        %v525 = vsel %vm455, %v522, %v524
        %v526 = vrot.slane %v437, 2
        %v527 = vrot.slane %v243, 2
        %v528 = vsel %vm455, %v526, %v527
        %v529 = vrot.slane %v276, 2
        %v530 = vsel %vm455, %v527, %v529
        %v531 = vrot.slane %v438, 2
        %v532 = vrot.slane %v245, 2
        %v533 = vsel %vm455, %v531, %v532
        %v534 = vrot.slane %v277, 2
        %v535 = vsel %vm455, %v532, %v534
        %s536 = scalar_lea.vmem %s179, 12
        %v537 = vld [vmem:[%s536] sm:$0xf]
        %v538 = vld [vmem:[%s536 + $0x4] sm:$0xf]
        %v539 = vld [vmem:[%s536 + $0xc] sm:$0xf]
        %v540 = vld [vmem:[%s536 + $0x10] sm:$0xf]
        %v541 = vld [vmem:[%s536 + $0x18] sm:$0xf]
        %v542 = vld [vmem:[%s536 + $0x1c] sm:$0xf]
        %v543 = vld [vmem:[%s536 + $0x24] sm:$0xf]
        %v544 = vld [vmem:[%s536 + $0x28] sm:$0xf]
        %v545 = vld [vmem:[%s536 + $0x30] sm:$0xf]
        %v546 = vld [vmem:[%s536 + $0x34] sm:$0xf]
        %v547 = vld [vmem:[%s536 + $0x3c] sm:$0xf]
        %v548 = vld [vmem:[%s536 + $0x40] sm:$0xf]
        %v549 = vld [vmem:[%s536 + $0x48] sm:$0xf]
        %v550 = vld [vmem:[%s536 + $0x4c] sm:$0xf]
        %v551 = vld [vmem:[%s536 + $0x54] sm:$0xf]
        %v552 = vld [vmem:[%s536 + $0x58] sm:$0xf]
        %v553 = vld [vmem:[%s536 + $0x60] sm:$0xf]
        %v554 = vld [vmem:[%s536 + $0x64] sm:$0xf]
        %v555 = vld [vmem:[%s536 + $0x6c] sm:$0xf]
        %v556 = vld [vmem:[%s536 + $0x70] sm:$0xf]
        %v557 = vld [vmem:[%s536 + $0x78] sm:$0xf]
        %v558 = vld [vmem:[%s536 + $0x7c] sm:$0xf]
        %v559 = vld [vmem:[%s536 + $0x84] sm:$0xf]
        %v560 = vld [vmem:[%s536 + $0x88] sm:$0xf]
        %v561 = vld [vmem:[%s536 + $0x90] sm:$0xf]
        %v562 = vld [vmem:[%s536 + $0x94] sm:$0xf]
        %v563 = vld [vmem:[%s536 + $0x9c] sm:$0xf]
        %v564 = vld [vmem:[%s536 + $0xa0] sm:$0xf]
        %v565 = vld [vmem:[%s536 + $0xa8] sm:$0xf]
        %v566 = vld [vmem:[%s536 + $0xac] sm:$0xf]
        %v567 = vld [vmem:[%s536 + $0xb4] sm:$0xf]
        %v568 = vld [vmem:[%s536 + $0xb8] sm:$0xf]
        %v569 = vunpack.c.l.bf16 %v537
        %v570 = vunpack.c.l.bf16 %v538
        %v571 = vunpack.c.l.bf16 %v539
        %v572 = vunpack.c.l.bf16 %v540
        %v573 = vunpack.c.l.bf16 %v541
        %v574 = vunpack.c.l.bf16 %v542
        %v575 = vunpack.c.l.bf16 %v543
        %v576 = vunpack.c.l.bf16 %v544
        %v577 = vunpack.c.l.bf16 %v545
        %v578 = vunpack.c.l.bf16 %v546
        %v579 = vunpack.c.l.bf16 %v547
        %v580 = vunpack.c.l.bf16 %v548
        %v581 = vunpack.c.l.bf16 %v549
        %v582 = vunpack.c.l.bf16 %v550
        %v583 = vunpack.c.l.bf16 %v551
        %v584 = vunpack.c.l.bf16 %v552
        %v585 = vunpack.c.l.bf16 %v553
        %v586 = vunpack.c.l.bf16 %v554
        %v587 = vunpack.c.l.bf16 %v555
        %v588 = vunpack.c.l.bf16 %v556
        %v589 = vunpack.c.l.bf16 %v557
        %v590 = vunpack.c.l.bf16 %v558
        %v591 = vunpack.c.l.bf16 %v559
        %v592 = vunpack.c.l.bf16 %v560
        %v593 = vunpack.c.l.bf16 %v561
        %v594 = vunpack.c.l.bf16 %v562
        %v595 = vunpack.c.l.bf16 %v563
        %v596 = vunpack.c.l.bf16 %v564
        %v597 = vunpack.c.l.bf16 %v565
        %v598 = vunpack.c.l.bf16 %v566
        %v599 = vunpack.c.l.bf16 %v567
        %v600 = vunpack.c.l.bf16 %v568
        %v601 = vld [vmem:[%s536 + $0x8] sm:$0x1]
        %v602 = vld [vmem:[%s536 + $0x14] sm:$0x1]
        %v603 = vld [vmem:[%s536 + $0x20] sm:$0x1]
        %v604 = vld [vmem:[%s536 + $0x2c] sm:$0x1]
        %v605 = vld [vmem:[%s536 + $0x38] sm:$0x1]
        %v606 = vld [vmem:[%s536 + $0x44] sm:$0x1]
        %v607 = vld [vmem:[%s536 + $0x50] sm:$0x1]
        %v608 = vld [vmem:[%s536 + $0x5c] sm:$0x1]
        %v609 = vld [vmem:[%s536 + $0x68] sm:$0x1]
        %v610 = vld [vmem:[%s536 + $0x74] sm:$0x1]
        %v611 = vld [vmem:[%s536 + $0x80] sm:$0x1]
        %v612 = vld [vmem:[%s536 + $0x8c] sm:$0x1]
        %v613 = vld [vmem:[%s536 + $0x98] sm:$0x1]
        %v614 = vld [vmem:[%s536 + $0xa4] sm:$0x1]
        %v615 = vld [vmem:[%s536 + $0xb0] sm:$0x1]
        %v616 = vld [vmem:[%s536 + $0xbc] sm:$0x1]
        %v617 = vunpack.c.l.bf16 %v601
        %v618 = vunpack.c.l.bf16 %v602
        %v619 = vunpack.c.l.bf16 %v603
        %v620 = vunpack.c.l.bf16 %v604
        %v621 = vunpack.c.l.bf16 %v605
        %v622 = vunpack.c.l.bf16 %v606
        %v623 = vunpack.c.l.bf16 %v607
        %v624 = vunpack.c.l.bf16 %v608
        %v625 = vunpack.c.l.bf16 %v609
        %v626 = vunpack.c.l.bf16 %v610
        %v627 = vunpack.c.l.bf16 %v611
        %v628 = vunpack.c.l.bf16 %v612
        %v629 = vunpack.c.l.bf16 %v613
        %v630 = vunpack.c.l.bf16 %v614
        %v631 = vunpack.c.l.bf16 %v615
        %v632 = vunpack.c.l.bf16 %v616
        %v681 = vrot.slane %v569, 1
        %v682 = vrot.slane %v570, 1
        %v683 = vsel %vm326, %v681, %v682
        %v684 = vrot.slane %v617, 1
        %v685 = vsel %vm326, %v682, %v684
        %v686 = vrot.slane %v571, 1
        %v687 = vrot.slane %v572, 1
        %v688 = vsel %vm326, %v686, %v687
        %v689 = vrot.slane %v618, 1
        %v690 = vsel %vm326, %v687, %v689
        %v691 = vrot.slane %v573, 1
        %v692 = vrot.slane %v574, 1
        %v693 = vsel %vm326, %v691, %v692
        %v694 = vrot.slane %v619, 1
        %v695 = vsel %vm326, %v692, %v694
        %v696 = vrot.slane %v575, 1
        %v697 = vrot.slane %v576, 1
        %v698 = vsel %vm326, %v696, %v697
        %v699 = vrot.slane %v620, 1
        %v700 = vsel %vm326, %v697, %v699
        %v701 = vrot.slane %v577, 1
        %v702 = vrot.slane %v578, 1
        %v703 = vsel %vm326, %v701, %v702
        %v704 = vrot.slane %v621, 1
        %v705 = vsel %vm326, %v702, %v704
        %v706 = vrot.slane %v579, 1
        %v707 = vrot.slane %v580, 1
        %v708 = vsel %vm326, %v706, %v707
        %v709 = vrot.slane %v622, 1
        %v710 = vsel %vm326, %v707, %v709
        %v711 = vrot.slane %v581, 1
        %v712 = vrot.slane %v582, 1
        %v713 = vsel %vm326, %v711, %v712
        %v714 = vrot.slane %v623, 1
        %v715 = vsel %vm326, %v712, %v714
        %v716 = vrot.slane %v583, 1
        %v717 = vrot.slane %v584, 1
        %v718 = vsel %vm326, %v716, %v717
        %v719 = vrot.slane %v624, 1
        %v720 = vsel %vm326, %v717, %v719
        %v721 = vrot.slane %v585, 1
        %v722 = vrot.slane %v586, 1
        %v723 = vsel %vm326, %v721, %v722
        %v724 = vrot.slane %v625, 1
        %v725 = vsel %vm326, %v722, %v724
        %v726 = vrot.slane %v587, 1
        %v727 = vrot.slane %v588, 1
        %v728 = vsel %vm326, %v726, %v727
        %v729 = vrot.slane %v626, 1
        %v730 = vsel %vm326, %v727, %v729
        %v731 = vrot.slane %v589, 1
        %v732 = vrot.slane %v590, 1
        %v733 = vsel %vm326, %v731, %v732
        %v734 = vrot.slane %v627, 1
        %v735 = vsel %vm326, %v732, %v734
        %v736 = vrot.slane %v591, 1
        %v737 = vrot.slane %v592, 1
        %v738 = vsel %vm326, %v736, %v737
        %v739 = vrot.slane %v628, 1
        %v740 = vsel %vm326, %v737, %v739
        %v741 = vrot.slane %v593, 1
        %v742 = vrot.slane %v594, 1
        %v743 = vsel %vm326, %v741, %v742
        %v744 = vrot.slane %v629, 1
        %v745 = vsel %vm326, %v742, %v744
        %v746 = vrot.slane %v595, 1
        %v747 = vrot.slane %v596, 1
        %v748 = vsel %vm326, %v746, %v747
        %v749 = vrot.slane %v630, 1
        %v750 = vsel %vm326, %v747, %v749
        %v751 = vrot.slane %v597, 1
        %v752 = vrot.slane %v598, 1
        %v753 = vsel %vm326, %v751, %v752
        %v754 = vrot.slane %v631, 1
        %v755 = vsel %vm326, %v752, %v754
        %v756 = vrot.slane %v599, 1
        %v757 = vrot.slane %v600, 1
        %v758 = vsel %vm326, %v756, %v757
        %v759 = vrot.slane %v632, 1
        %v760 = vsel %vm326, %v757, %v759
        %v761 = vld [vmem:[%s536] sm:$0xe]
        %v762 = vld [vmem:[%s536 + $0xc] sm:$0xe]
        %v763 = vld [vmem:[%s536 + $0x18] sm:$0xe]
        %v764 = vld [vmem:[%s536 + $0x24] sm:$0xe]
        %v765 = vld [vmem:[%s536 + $0x30] sm:$0xe]
        %v766 = vld [vmem:[%s536 + $0x3c] sm:$0xe]
        %v767 = vld [vmem:[%s536 + $0x48] sm:$0xe]
        %v768 = vld [vmem:[%s536 + $0x54] sm:$0xe]
        %v769 = vld [vmem:[%s536 + $0x60] sm:$0xe]
        %v770 = vld [vmem:[%s536 + $0x6c] sm:$0xe]
        %v771 = vld [vmem:[%s536 + $0x78] sm:$0xe]
        %v772 = vld [vmem:[%s536 + $0x84] sm:$0xe]
        %v773 = vld [vmem:[%s536 + $0x90] sm:$0xe]
        %v774 = vld [vmem:[%s536 + $0x9c] sm:$0xe]
        %v775 = vld [vmem:[%s536 + $0xa8] sm:$0xe]
        %v776 = vld [vmem:[%s536 + $0xb4] sm:$0xe]
        %v777 = vunpack.c.l.bf16 %v761
        %v778 = vunpack.c.l.bf16 %v762
        %v779 = vunpack.c.l.bf16 %v763
        %v780 = vunpack.c.l.bf16 %v764
        %v781 = vunpack.c.l.bf16 %v765
        %v782 = vunpack.c.l.bf16 %v766
        %v783 = vunpack.c.l.bf16 %v767
        %v784 = vunpack.c.l.bf16 %v768
        %v785 = vunpack.c.l.bf16 %v769
        %v786 = vunpack.c.l.bf16 %v770
        %v787 = vunpack.c.l.bf16 %v771
        %v788 = vunpack.c.l.bf16 %v772
        %v789 = vunpack.c.l.bf16 %v773
        %v790 = vunpack.c.l.bf16 %v774
        %v791 = vunpack.c.l.bf16 %v775
        %v792 = vunpack.c.l.bf16 %v776
        %v809 = vrot.slane %v777, 2
        %v810 = vrot.slane %v570, 2
        %v811 = vsel %vm455, %v809, %v810
        %v812 = vrot.slane %v617, 2
        %v813 = vsel %vm455, %v810, %v812
        %v814 = vrot.slane %v778, 2
        %v815 = vrot.slane %v572, 2
        %v816 = vsel %vm455, %v814, %v815
        %v817 = vrot.slane %v618, 2
        %v818 = vsel %vm455, %v815, %v817
        %v819 = vrot.slane %v779, 2
        %v820 = vrot.slane %v574, 2
        %v821 = vsel %vm455, %v819, %v820
        %v822 = vrot.slane %v619, 2
        %v823 = vsel %vm455, %v820, %v822
        %v824 = vrot.slane %v780, 2
        %v825 = vrot.slane %v576, 2
        %v826 = vsel %vm455, %v824, %v825
        %v827 = vrot.slane %v620, 2
        %v828 = vsel %vm455, %v825, %v827
        %v829 = vrot.slane %v781, 2
        %v830 = vrot.slane %v578, 2
        %v831 = vsel %vm455, %v829, %v830
        %v832 = vrot.slane %v621, 2
        %v833 = vsel %vm455, %v830, %v832
        %v834 = vrot.slane %v782, 2
        %v835 = vrot.slane %v580, 2
        %v836 = vsel %vm455, %v834, %v835
        %v837 = vrot.slane %v622, 2
        %v838 = vsel %vm455, %v835, %v837
        %v839 = vrot.slane %v783, 2
        %v840 = vrot.slane %v582, 2
        %v841 = vsel %vm455, %v839, %v840
        %v842 = vrot.slane %v623, 2
        %v843 = vsel %vm455, %v840, %v842
        %v844 = vrot.slane %v784, 2
        %v845 = vrot.slane %v584, 2
        %v846 = vsel %vm455, %v844, %v845
        %v847 = vrot.slane %v624, 2
        %v848 = vsel %vm455, %v845, %v847
        %v849 = vrot.slane %v785, 2
        %v850 = vrot.slane %v586, 2
        %v851 = vsel %vm455, %v849, %v850
        %v852 = vrot.slane %v625, 2
        %v853 = vsel %vm455, %v850, %v852
        %v854 = vrot.slane %v786, 2
        %v855 = vrot.slane %v588, 2
        %v856 = vsel %vm455, %v854, %v855
        %v857 = vrot.slane %v626, 2
        %v858 = vsel %vm455, %v855, %v857
        %v859 = vrot.slane %v787, 2
        %v860 = vrot.slane %v590, 2
        %v861 = vsel %vm455, %v859, %v860
        %v862 = vrot.slane %v627, 2
        %v863 = vsel %vm455, %v860, %v862
        %v864 = vrot.slane %v788, 2
        %v865 = vrot.slane %v592, 2
        %v866 = vsel %vm455, %v864, %v865
        %v867 = vrot.slane %v628, 2
        %v868 = vsel %vm455, %v865, %v867
        %v869 = vrot.slane %v789, 2
        %v870 = vrot.slane %v594, 2
        %v871 = vsel %vm455, %v869, %v870
        %v872 = vrot.slane %v629, 2
        %v873 = vsel %vm455, %v870, %v872
        %v874 = vrot.slane %v790, 2
        %v875 = vrot.slane %v596, 2
        %v876 = vsel %vm455, %v874, %v875
        %v877 = vrot.slane %v630, 2
        %v878 = vsel %vm455, %v875, %v877
        %v879 = vrot.slane %v791, 2
        %v880 = vrot.slane %v598, 2
        %v881 = vsel %vm455, %v879, %v880
        %v882 = vrot.slane %v631, 2
        %v883 = vsel %vm455, %v880, %v882
        %v884 = vrot.slane %v792, 2
        %v885 = vrot.slane %v600, 2
        %v886 = vsel %vm455, %v884, %v885
        %v887 = vrot.slane %v632, 2
        %v888 = vsel %vm455, %v885, %v887
        %s889 = scalar_lea.vmem %s179, 24
        %v890 = vld [vmem:[%s889] sm:$0xf]
        %v891 = vld [vmem:[%s889 + $0x4] sm:$0xf]
        %v892 = vld [vmem:[%s889 + $0xc] sm:$0xf]
        %v893 = vld [vmem:[%s889 + $0x10] sm:$0xf]
        %v894 = vld [vmem:[%s889 + $0x18] sm:$0xf]
        %v895 = vld [vmem:[%s889 + $0x1c] sm:$0xf]
        %v896 = vld [vmem:[%s889 + $0x24] sm:$0xf]
        %v897 = vld [vmem:[%s889 + $0x28] sm:$0xf]
        %v898 = vld [vmem:[%s889 + $0x30] sm:$0xf]
        %v899 = vld [vmem:[%s889 + $0x34] sm:$0xf]
        %v900 = vld [vmem:[%s889 + $0x3c] sm:$0xf]
        %v901 = vld [vmem:[%s889 + $0x40] sm:$0xf]
        %v902 = vld [vmem:[%s889 + $0x48] sm:$0xf]
        %v903 = vld [vmem:[%s889 + $0x4c] sm:$0xf]
        %v904 = vld [vmem:[%s889 + $0x54] sm:$0xf]
        %v905 = vld [vmem:[%s889 + $0x58] sm:$0xf]
        %v906 = vld [vmem:[%s889 + $0x60] sm:$0xf]
        %v907 = vld [vmem:[%s889 + $0x64] sm:$0xf]
        %v908 = vld [vmem:[%s889 + $0x6c] sm:$0xf]
        %v909 = vld [vmem:[%s889 + $0x70] sm:$0xf]
        %v910 = vld [vmem:[%s889 + $0x78] sm:$0xf]
        %v911 = vld [vmem:[%s889 + $0x7c] sm:$0xf]
        %v912 = vld [vmem:[%s889 + $0x84] sm:$0xf]
        %v913 = vld [vmem:[%s889 + $0x88] sm:$0xf]
        %v914 = vld [vmem:[%s889 + $0x90] sm:$0xf]
        %v915 = vld [vmem:[%s889 + $0x94] sm:$0xf]
        %v916 = vld [vmem:[%s889 + $0x9c] sm:$0xf]
        %v917 = vld [vmem:[%s889 + $0xa0] sm:$0xf]
        %v918 = vld [vmem:[%s889 + $0xa8] sm:$0xf]
        %v919 = vld [vmem:[%s889 + $0xac] sm:$0xf]
        %v920 = vld [vmem:[%s889 + $0xb4] sm:$0xf]
        %v921 = vld [vmem:[%s889 + $0xb8] sm:$0xf]
        %v922 = vunpack.c.l.bf16 %v890
        %v923 = vunpack.c.l.bf16 %v891
        %v924 = vunpack.c.l.bf16 %v892
        %v925 = vunpack.c.l.bf16 %v893
        %v926 = vunpack.c.l.bf16 %v894
        %v927 = vunpack.c.l.bf16 %v895
        %v928 = vunpack.c.l.bf16 %v896
        %v929 = vunpack.c.l.bf16 %v897
        %v930 = vunpack.c.l.bf16 %v898
        %v931 = vunpack.c.l.bf16 %v899
        %v932 = vunpack.c.l.bf16 %v900
        %v933 = vunpack.c.l.bf16 %v901
        %v934 = vunpack.c.l.bf16 %v902
        %v935 = vunpack.c.l.bf16 %v903
        %v936 = vunpack.c.l.bf16 %v904
        %v937 = vunpack.c.l.bf16 %v905
        %v938 = vunpack.c.l.bf16 %v906
        %v939 = vunpack.c.l.bf16 %v907
        %v940 = vunpack.c.l.bf16 %v908
        %v941 = vunpack.c.l.bf16 %v909
        %v942 = vunpack.c.l.bf16 %v910
        %v943 = vunpack.c.l.bf16 %v911
        %v944 = vunpack.c.l.bf16 %v912
        %v945 = vunpack.c.l.bf16 %v913
        %v946 = vunpack.c.l.bf16 %v914
        %v947 = vunpack.c.l.bf16 %v915
        %v948 = vunpack.c.l.bf16 %v916
        %v949 = vunpack.c.l.bf16 %v917
        %v950 = vunpack.c.l.bf16 %v918
        %v951 = vunpack.c.l.bf16 %v919
        %v952 = vunpack.c.l.bf16 %v920
        %v953 = vunpack.c.l.bf16 %v921
        %v954 = vld [vmem:[%s889 + $0x8] sm:$0x1]
        %v955 = vld [vmem:[%s889 + $0x14] sm:$0x1]
        %v956 = vld [vmem:[%s889 + $0x20] sm:$0x1]
        %v957 = vld [vmem:[%s889 + $0x2c] sm:$0x1]
        %v958 = vld [vmem:[%s889 + $0x38] sm:$0x1]
        %v959 = vld [vmem:[%s889 + $0x44] sm:$0x1]
        %v960 = vld [vmem:[%s889 + $0x50] sm:$0x1]
        %v961 = vld [vmem:[%s889 + $0x5c] sm:$0x1]
        %v962 = vld [vmem:[%s889 + $0x68] sm:$0x1]
        %v963 = vld [vmem:[%s889 + $0x74] sm:$0x1]
        %v964 = vld [vmem:[%s889 + $0x80] sm:$0x1]
        %v965 = vld [vmem:[%s889 + $0x8c] sm:$0x1]
        %v966 = vld [vmem:[%s889 + $0x98] sm:$0x1]
        %v967 = vld [vmem:[%s889 + $0xa4] sm:$0x1]
        %v968 = vld [vmem:[%s889 + $0xb0] sm:$0x1]
        %v969 = vld [vmem:[%s889 + $0xbc] sm:$0x1]
        %v970 = vunpack.c.l.bf16 %v954
        %v971 = vunpack.c.l.bf16 %v955
        %v972 = vunpack.c.l.bf16 %v956
        %v973 = vunpack.c.l.bf16 %v957
        %v974 = vunpack.c.l.bf16 %v958
        %v975 = vunpack.c.l.bf16 %v959
        %v976 = vunpack.c.l.bf16 %v960
        %v977 = vunpack.c.l.bf16 %v961
        %v978 = vunpack.c.l.bf16 %v962
        %v979 = vunpack.c.l.bf16 %v963
        %v980 = vunpack.c.l.bf16 %v964
        %v981 = vunpack.c.l.bf16 %v965
        %v982 = vunpack.c.l.bf16 %v966
        %v983 = vunpack.c.l.bf16 %v967
        %v984 = vunpack.c.l.bf16 %v968
        %v985 = vunpack.c.l.bf16 %v969
        %v1034 = vrot.slane %v922, 1
        %v1035 = vrot.slane %v923, 1
        %v1036 = vsel %vm326, %v1034, %v1035
        %v1037 = vrot.slane %v970, 1
        %v1038 = vsel %vm326, %v1035, %v1037
        %v1039 = vrot.slane %v924, 1
        %v1040 = vrot.slane %v925, 1
        %v1041 = vsel %vm326, %v1039, %v1040
        %v1042 = vrot.slane %v971, 1
        %v1043 = vsel %vm326, %v1040, %v1042
        %v1044 = vrot.slane %v926, 1
        %v1045 = vrot.slane %v927, 1
        %v1046 = vsel %vm326, %v1044, %v1045
        %v1047 = vrot.slane %v972, 1
        %v1048 = vsel %vm326, %v1045, %v1047
        %v1049 = vrot.slane %v928, 1
        %v1050 = vrot.slane %v929, 1
        %v1051 = vsel %vm326, %v1049, %v1050
        %v1052 = vrot.slane %v973, 1
        %v1053 = vsel %vm326, %v1050, %v1052
        %v1054 = vrot.slane %v930, 1
        %v1055 = vrot.slane %v931, 1
        %v1056 = vsel %vm326, %v1054, %v1055
        %v1057 = vrot.slane %v974, 1
        %v1058 = vsel %vm326, %v1055, %v1057
        %v1059 = vrot.slane %v932, 1
        %v1060 = vrot.slane %v933, 1
        %v1061 = vsel %vm326, %v1059, %v1060
        %v1062 = vrot.slane %v975, 1
        %v1063 = vsel %vm326, %v1060, %v1062
        %v1064 = vrot.slane %v934, 1
        %v1065 = vrot.slane %v935, 1
        %v1066 = vsel %vm326, %v1064, %v1065
        %v1067 = vrot.slane %v976, 1
        %v1068 = vsel %vm326, %v1065, %v1067
        %v1069 = vrot.slane %v936, 1
        %v1070 = vrot.slane %v937, 1
        %v1071 = vsel %vm326, %v1069, %v1070
        %v1072 = vrot.slane %v977, 1
        %v1073 = vsel %vm326, %v1070, %v1072
        %v1074 = vrot.slane %v938, 1
        %v1075 = vrot.slane %v939, 1
        %v1076 = vsel %vm326, %v1074, %v1075
        %v1077 = vrot.slane %v978, 1
        %v1078 = vsel %vm326, %v1075, %v1077
        %v1079 = vrot.slane %v940, 1
        %v1080 = vrot.slane %v941, 1
        %v1081 = vsel %vm326, %v1079, %v1080
        %v1082 = vrot.slane %v979, 1
        %v1083 = vsel %vm326, %v1080, %v1082
        %v1084 = vrot.slane %v942, 1
        %v1085 = vrot.slane %v943, 1
        %v1086 = vsel %vm326, %v1084, %v1085
        %v1087 = vrot.slane %v980, 1
        %v1088 = vsel %vm326, %v1085, %v1087
        %v1089 = vrot.slane %v944, 1
        %v1090 = vrot.slane %v945, 1
        %v1091 = vsel %vm326, %v1089, %v1090
        %v1092 = vrot.slane %v981, 1
        %v1093 = vsel %vm326, %v1090, %v1092
        %v1094 = vrot.slane %v946, 1
        %v1095 = vrot.slane %v947, 1
        %v1096 = vsel %vm326, %v1094, %v1095
        %v1097 = vrot.slane %v982, 1
        %v1098 = vsel %vm326, %v1095, %v1097
        %v1099 = vrot.slane %v948, 1
        %v1100 = vrot.slane %v949, 1
        %v1101 = vsel %vm326, %v1099, %v1100
        %v1102 = vrot.slane %v983, 1
        %v1103 = vsel %vm326, %v1100, %v1102
        %v1104 = vrot.slane %v950, 1
        %v1105 = vrot.slane %v951, 1
        %v1106 = vsel %vm326, %v1104, %v1105
        %v1107 = vrot.slane %v984, 1
        %v1108 = vsel %vm326, %v1105, %v1107
        %v1109 = vrot.slane %v952, 1
        %v1110 = vrot.slane %v953, 1
        %v1111 = vsel %vm326, %v1109, %v1110
        %v1112 = vrot.slane %v985, 1
        %v1113 = vsel %vm326, %v1110, %v1112
        %v1114 = vld [vmem:[%s889] sm:$0xe]
        %v1115 = vld [vmem:[%s889 + $0xc] sm:$0xe]
        %v1116 = vld [vmem:[%s889 + $0x18] sm:$0xe]
        %v1117 = vld [vmem:[%s889 + $0x24] sm:$0xe]
        %v1118 = vld [vmem:[%s889 + $0x30] sm:$0xe]
        %v1119 = vld [vmem:[%s889 + $0x3c] sm:$0xe]
        %v1120 = vld [vmem:[%s889 + $0x48] sm:$0xe]
        %v1121 = vld [vmem:[%s889 + $0x54] sm:$0xe]
        %v1122 = vld [vmem:[%s889 + $0x60] sm:$0xe]
        %v1123 = vld [vmem:[%s889 + $0x6c] sm:$0xe]
        %v1124 = vld [vmem:[%s889 + $0x78] sm:$0xe]
        %v1125 = vld [vmem:[%s889 + $0x84] sm:$0xe]
        %v1126 = vld [vmem:[%s889 + $0x90] sm:$0xe]
        %v1127 = vld [vmem:[%s889 + $0x9c] sm:$0xe]
        %v1128 = vld [vmem:[%s889 + $0xa8] sm:$0xe]
        %v1129 = vld [vmem:[%s889 + $0xb4] sm:$0xe]
        %v1130 = vunpack.c.l.bf16 %v1114
        %v1131 = vunpack.c.l.bf16 %v1115
        %v1132 = vunpack.c.l.bf16 %v1116
        %v1133 = vunpack.c.l.bf16 %v1117
        %v1134 = vunpack.c.l.bf16 %v1118
        %v1135 = vunpack.c.l.bf16 %v1119
        %v1136 = vunpack.c.l.bf16 %v1120
        %v1137 = vunpack.c.l.bf16 %v1121
        %v1138 = vunpack.c.l.bf16 %v1122
        %v1139 = vunpack.c.l.bf16 %v1123
        %v1140 = vunpack.c.l.bf16 %v1124
        %v1141 = vunpack.c.l.bf16 %v1125
        %v1142 = vunpack.c.l.bf16 %v1126
        %v1143 = vunpack.c.l.bf16 %v1127
        %v1144 = vunpack.c.l.bf16 %v1128
        %v1145 = vunpack.c.l.bf16 %v1129
        %v1162 = vrot.slane %v1130, 2
        %v1163 = vrot.slane %v923, 2
        %v1164 = vsel %vm455, %v1162, %v1163
        %v1165 = vrot.slane %v970, 2
        %v1166 = vsel %vm455, %v1163, %v1165
        %v1167 = vrot.slane %v1131, 2
        %v1168 = vrot.slane %v925, 2
        %v1169 = vsel %vm455, %v1167, %v1168
        %v1170 = vrot.slane %v971, 2
        %v1171 = vsel %vm455, %v1168, %v1170
        %v1172 = vrot.slane %v1132, 2
        %v1173 = vrot.slane %v927, 2
        %v1174 = vsel %vm455, %v1172, %v1173
        %v1175 = vrot.slane %v972, 2
        %v1176 = vsel %vm455, %v1173, %v1175
        %v1177 = vrot.slane %v1133, 2
        %v1178 = vrot.slane %v929, 2
        %v1179 = vsel %vm455, %v1177, %v1178
        %v1180 = vrot.slane %v973, 2
        %v1181 = vsel %vm455, %v1178, %v1180
        %v1182 = vrot.slane %v1134, 2
        %v1183 = vrot.slane %v931, 2
        %v1184 = vsel %vm455, %v1182, %v1183
        %v1185 = vrot.slane %v974, 2
        %v1186 = vsel %vm455, %v1183, %v1185
        %v1187 = vrot.slane %v1135, 2
        %v1188 = vrot.slane %v933, 2
        %v1189 = vsel %vm455, %v1187, %v1188
        %v1190 = vrot.slane %v975, 2
        %v1191 = vsel %vm455, %v1188, %v1190
        %v1192 = vrot.slane %v1136, 2
        %v1193 = vrot.slane %v935, 2
        %v1194 = vsel %vm455, %v1192, %v1193
        %v1195 = vrot.slane %v976, 2
        %v1196 = vsel %vm455, %v1193, %v1195
        %v1197 = vrot.slane %v1137, 2
        %v1198 = vrot.slane %v937, 2
        %v1199 = vsel %vm455, %v1197, %v1198
        %v1200 = vrot.slane %v977, 2
        %v1201 = vsel %vm455, %v1198, %v1200
        %v1202 = vrot.slane %v1138, 2
        %v1203 = vrot.slane %v939, 2
        %v1204 = vsel %vm455, %v1202, %v1203
        %v1205 = vrot.slane %v978, 2
        %v1206 = vsel %vm455, %v1203, %v1205
        %v1207 = vrot.slane %v1139, 2
        %v1208 = vrot.slane %v941, 2
        %v1209 = vsel %vm455, %v1207, %v1208
        %v1210 = vrot.slane %v979, 2
        %v1211 = vsel %vm455, %v1208, %v1210
        %v1212 = vrot.slane %v1140, 2
        %v1213 = vrot.slane %v943, 2
        %v1214 = vsel %vm455, %v1212, %v1213
        %v1215 = vrot.slane %v980, 2
        %v1216 = vsel %vm455, %v1213, %v1215
        %v1217 = vrot.slane %v1141, 2
        %v1218 = vrot.slane %v945, 2
        %v1219 = vsel %vm455, %v1217, %v1218
        %v1220 = vrot.slane %v981, 2
        %v1221 = vsel %vm455, %v1218, %v1220
        %v1222 = vrot.slane %v1142, 2
        %v1223 = vrot.slane %v947, 2
        %v1224 = vsel %vm455, %v1222, %v1223
        %v1225 = vrot.slane %v982, 2
        %v1226 = vsel %vm455, %v1223, %v1225
        %v1227 = vrot.slane %v1143, 2
        %v1228 = vrot.slane %v949, 2
        %v1229 = vsel %vm455, %v1227, %v1228
        %v1230 = vrot.slane %v983, 2
        %v1231 = vsel %vm455, %v1228, %v1230
        %v1232 = vrot.slane %v1144, 2
        %v1233 = vrot.slane %v951, 2
        %v1234 = vsel %vm455, %v1232, %v1233
        %v1235 = vrot.slane %v984, 2
        %v1236 = vsel %vm455, %v1233, %v1235
        %v1237 = vrot.slane %v1145, 2
        %v1238 = vrot.slane %v953, 2
        %v1239 = vsel %vm455, %v1237, %v1238
        %v1240 = vrot.slane %v985, 2
        %v1241 = vsel %vm455, %v1238, %v1240
        %1242 = vrot.lane.b32.xlu0 %v329, 4
        %v1243 = vpop.permute.xlu0 %1242
        %1244 = vrot.lane.b32.xlu0 %v331, 4
        %v1245 = vpop.permute.xlu0 %1244
        %1246 = vrot.lane.b32.xlu0 %v334, 4
        %v1247 = vpop.permute.xlu0 %1246
        %1248 = vrot.lane.b32.xlu0 %v336, 4
        %v1249 = vpop.permute.xlu0 %1248
        %1250 = vrot.lane.b32.xlu0 %v339, 4
        %v1251 = vpop.permute.xlu0 %1250
        %1252 = vrot.lane.b32.xlu0 %v341, 4
        %v1253 = vpop.permute.xlu0 %1252
        %1254 = vrot.lane.b32.xlu0 %v344, 4
        %v1255 = vpop.permute.xlu0 %1254
        %1256 = vrot.lane.b32.xlu0 %v346, 4
        %v1257 = vpop.permute.xlu0 %1256
        %1258 = vrot.lane.b32.xlu0 %v349, 4
        %v1259 = vpop.permute.xlu0 %1258
        %1260 = vrot.lane.b32.xlu0 %v351, 4
        %v1261 = vpop.permute.xlu0 %1260
        %1262 = vrot.lane.b32.xlu0 %v354, 4
        %v1263 = vpop.permute.xlu0 %1262
        %1264 = vrot.lane.b32.xlu0 %v356, 4
        %v1265 = vpop.permute.xlu0 %1264
        %1266 = vrot.lane.b32.xlu0 %v359, 4
        %v1267 = vpop.permute.xlu0 %1266
        %1268 = vrot.lane.b32.xlu0 %v361, 4
        %v1269 = vpop.permute.xlu0 %1268
        %1270 = vrot.lane.b32.xlu0 %v364, 4
        %v1271 = vpop.permute.xlu0 %1270
        %1272 = vrot.lane.b32.xlu0 %v366, 4
        %v1273 = vpop.permute.xlu0 %1272
        %1274 = vrot.lane.b32.xlu0 %v369, 4
        %v1275 = vpop.permute.xlu0 %1274
        %1276 = vrot.lane.b32.xlu0 %v371, 4
        %v1277 = vpop.permute.xlu0 %1276
        %1278 = vrot.lane.b32.xlu0 %v374, 4
        %v1279 = vpop.permute.xlu0 %1278
        %1280 = vrot.lane.b32.xlu0 %v376, 4
        %v1281 = vpop.permute.xlu0 %1280
        %1282 = vrot.lane.b32.xlu0 %v379, 4
        %v1283 = vpop.permute.xlu0 %1282
        %1284 = vrot.lane.b32.xlu0 %v381, 4
        %v1285 = vpop.permute.xlu0 %1284
        %1286 = vrot.lane.b32.xlu0 %v384, 4
        %v1287 = vpop.permute.xlu0 %1286
        %1288 = vrot.lane.b32.xlu0 %v386, 4
        %v1289 = vpop.permute.xlu0 %1288
        %1290 = vrot.lane.b32.xlu0 %v389, 4
        %v1291 = vpop.permute.xlu0 %1290
        %1292 = vrot.lane.b32.xlu0 %v391, 4
        %v1293 = vpop.permute.xlu0 %1292
        %1294 = vrot.lane.b32.xlu0 %v394, 4
        %v1295 = vpop.permute.xlu0 %1294
        %1296 = vrot.lane.b32.xlu0 %v396, 4
        %v1297 = vpop.permute.xlu0 %1296
        %1298 = vrot.lane.b32.xlu0 %v399, 4
        %v1299 = vpop.permute.xlu0 %1298
        %1300 = vrot.lane.b32.xlu0 %v401, 4
        %v1301 = vpop.permute.xlu0 %1300
        %1302 = vrot.lane.b32.xlu0 %v404, 4
        %v1303 = vpop.permute.xlu0 %1302
        %1304 = vrot.lane.b32.xlu0 %v406, 4
        %v1305 = vpop.permute.xlu0 %1304
        %1338 = vrot.lane.b32.xlu0 %v458, 8
        %v1339 = vpop.permute.xlu0 %1338
        %1340 = vrot.lane.b32.xlu0 %v460, 8
        %v1341 = vpop.permute.xlu0 %1340
        %1342 = vrot.lane.b32.xlu0 %v463, 8
        %v1343 = vpop.permute.xlu0 %1342
        %1344 = vrot.lane.b32.xlu0 %v465, 8
        %v1345 = vpop.permute.xlu0 %1344
        %1346 = vrot.lane.b32.xlu0 %v468, 8
        %v1347 = vpop.permute.xlu0 %1346
        %1348 = vrot.lane.b32.xlu0 %v470, 8
        %v1349 = vpop.permute.xlu0 %1348
        %1350 = vrot.lane.b32.xlu0 %v473, 8
        %v1351 = vpop.permute.xlu0 %1350
        %1352 = vrot.lane.b32.xlu0 %v475, 8
        %v1353 = vpop.permute.xlu0 %1352
        %1354 = vrot.lane.b32.xlu0 %v478, 8
        %v1355 = vpop.permute.xlu0 %1354
        %1356 = vrot.lane.b32.xlu0 %v480, 8
        %v1357 = vpop.permute.xlu0 %1356
        %1358 = vrot.lane.b32.xlu0 %v483, 8
        %v1359 = vpop.permute.xlu0 %1358
        %1360 = vrot.lane.b32.xlu0 %v485, 8
        %v1361 = vpop.permute.xlu0 %1360
        %1362 = vrot.lane.b32.xlu0 %v488, 8
        %v1363 = vpop.permute.xlu0 %1362
        %1364 = vrot.lane.b32.xlu0 %v490, 8
        %v1365 = vpop.permute.xlu0 %1364
        %1366 = vrot.lane.b32.xlu0 %v493, 8
        %v1367 = vpop.permute.xlu0 %1366
        %1368 = vrot.lane.b32.xlu0 %v495, 8
        %v1369 = vpop.permute.xlu0 %1368
        %1370 = vrot.lane.b32.xlu0 %v498, 8
        %v1371 = vpop.permute.xlu0 %1370
        %1372 = vrot.lane.b32.xlu0 %v500, 8
        %v1373 = vpop.permute.xlu0 %1372
        %1374 = vrot.lane.b32.xlu0 %v503, 8
        %v1375 = vpop.permute.xlu0 %1374
        %1376 = vrot.lane.b32.xlu0 %v505, 8
        %v1377 = vpop.permute.xlu0 %1376
        %1378 = vrot.lane.b32.xlu0 %v508, 8
        %v1379 = vpop.permute.xlu0 %1378
        %1380 = vrot.lane.b32.xlu0 %v510, 8
        %v1381 = vpop.permute.xlu0 %1380
        %1382 = vrot.lane.b32.xlu0 %v513, 8
        %v1383 = vpop.permute.xlu0 %1382
        %1384 = vrot.lane.b32.xlu0 %v515, 8
        %v1385 = vpop.permute.xlu0 %1384
        %1386 = vrot.lane.b32.xlu0 %v518, 8
        %v1387 = vpop.permute.xlu0 %1386
        %1388 = vrot.lane.b32.xlu0 %v520, 8
        %v1389 = vpop.permute.xlu0 %1388
        %1390 = vrot.lane.b32.xlu0 %v523, 8
        %v1391 = vpop.permute.xlu0 %1390
        %1392 = vrot.lane.b32.xlu0 %v525, 8
        %v1393 = vpop.permute.xlu0 %1392
        %1394 = vrot.lane.b32.xlu0 %v528, 8
        %v1395 = vpop.permute.xlu0 %1394
        %1396 = vrot.lane.b32.xlu0 %v530, 8
        %v1397 = vpop.permute.xlu0 %1396
        %1398 = vrot.lane.b32.xlu0 %v533, 8
        %v1399 = vpop.permute.xlu0 %1398
        %1400 = vrot.lane.b32.xlu0 %v535, 8
        %v1401 = vpop.permute.xlu0 %1400
        %1434 = vrot.lane.b32.xlu0 %v569, 12
        %v1435 = vpop.permute.xlu0 %1434
        %1436 = vrot.lane.b32.xlu0 %v570, 12
        %v1437 = vpop.permute.xlu0 %1436
        %1438 = vrot.lane.b32.xlu0 %v571, 12
        %v1439 = vpop.permute.xlu0 %1438
        %1440 = vrot.lane.b32.xlu0 %v572, 12
        %v1441 = vpop.permute.xlu0 %1440
        %1442 = vrot.lane.b32.xlu0 %v573, 12
        %v1443 = vpop.permute.xlu0 %1442
        %1444 = vrot.lane.b32.xlu0 %v574, 12
        %v1445 = vpop.permute.xlu0 %1444
        %1446 = vrot.lane.b32.xlu0 %v575, 12
        %v1447 = vpop.permute.xlu0 %1446
        %1448 = vrot.lane.b32.xlu0 %v576, 12
        %v1449 = vpop.permute.xlu0 %1448
        %1450 = vrot.lane.b32.xlu0 %v577, 12
        %v1451 = vpop.permute.xlu0 %1450
        %1452 = vrot.lane.b32.xlu0 %v578, 12
        %v1453 = vpop.permute.xlu0 %1452
        %1454 = vrot.lane.b32.xlu0 %v579, 12
        %v1455 = vpop.permute.xlu0 %1454
        %1456 = vrot.lane.b32.xlu0 %v580, 12
        %v1457 = vpop.permute.xlu0 %1456
        %1458 = vrot.lane.b32.xlu0 %v581, 12
        %v1459 = vpop.permute.xlu0 %1458
        %1460 = vrot.lane.b32.xlu0 %v582, 12
        %v1461 = vpop.permute.xlu0 %1460
        %1462 = vrot.lane.b32.xlu0 %v583, 12
        %v1463 = vpop.permute.xlu0 %1462
        %1464 = vrot.lane.b32.xlu0 %v584, 12
        %v1465 = vpop.permute.xlu0 %1464
        %1466 = vrot.lane.b32.xlu0 %v585, 12
        %v1467 = vpop.permute.xlu0 %1466
        %1468 = vrot.lane.b32.xlu0 %v586, 12
        %v1469 = vpop.permute.xlu0 %1468
        %1470 = vrot.lane.b32.xlu0 %v587, 12
        %v1471 = vpop.permute.xlu0 %1470
        %1472 = vrot.lane.b32.xlu0 %v588, 12
        %v1473 = vpop.permute.xlu0 %1472
        %1474 = vrot.lane.b32.xlu0 %v589, 12
        %v1475 = vpop.permute.xlu0 %1474
        %1476 = vrot.lane.b32.xlu0 %v590, 12
        %v1477 = vpop.permute.xlu0 %1476
        %1478 = vrot.lane.b32.xlu0 %v591, 12
        %v1479 = vpop.permute.xlu0 %1478
        %1480 = vrot.lane.b32.xlu0 %v592, 12
        %v1481 = vpop.permute.xlu0 %1480
        %1482 = vrot.lane.b32.xlu0 %v593, 12
        %v1483 = vpop.permute.xlu0 %1482
        %1484 = vrot.lane.b32.xlu0 %v594, 12
        %v1485 = vpop.permute.xlu0 %1484
        %1486 = vrot.lane.b32.xlu0 %v595, 12
        %v1487 = vpop.permute.xlu0 %1486
        %1488 = vrot.lane.b32.xlu0 %v596, 12
        %v1489 = vpop.permute.xlu0 %1488
        %1490 = vrot.lane.b32.xlu0 %v597, 12
        %v1491 = vpop.permute.xlu0 %1490
        %1492 = vrot.lane.b32.xlu0 %v598, 12
        %v1493 = vpop.permute.xlu0 %1492
        %1494 = vrot.lane.b32.xlu0 %v599, 12
        %v1495 = vpop.permute.xlu0 %1494
        %1496 = vrot.lane.b32.xlu0 %v600, 12
        %v1497 = vpop.permute.xlu0 %1496
        %1530 = vrot.lane.b32.xlu0 %v683, 16
        %v1531 = vpop.permute.xlu0 %1530
        %1532 = vrot.lane.b32.xlu0 %v685, 16
        %v1533 = vpop.permute.xlu0 %1532
        %1534 = vrot.lane.b32.xlu0 %v688, 16
        %v1535 = vpop.permute.xlu0 %1534
        %1536 = vrot.lane.b32.xlu0 %v690, 16
        %v1537 = vpop.permute.xlu0 %1536
        %1538 = vrot.lane.b32.xlu0 %v693, 16
        %v1539 = vpop.permute.xlu0 %1538
        %1540 = vrot.lane.b32.xlu0 %v695, 16
        %v1541 = vpop.permute.xlu0 %1540
        %1542 = vrot.lane.b32.xlu0 %v698, 16
        %v1543 = vpop.permute.xlu0 %1542
        %1544 = vrot.lane.b32.xlu0 %v700, 16
        %v1545 = vpop.permute.xlu0 %1544
        %1546 = vrot.lane.b32.xlu0 %v703, 16
        %v1547 = vpop.permute.xlu0 %1546
        %1548 = vrot.lane.b32.xlu0 %v705, 16
        %v1549 = vpop.permute.xlu0 %1548
        %1550 = vrot.lane.b32.xlu0 %v708, 16
        %v1551 = vpop.permute.xlu0 %1550
        %1552 = vrot.lane.b32.xlu0 %v710, 16
        %v1553 = vpop.permute.xlu0 %1552
        %1554 = vrot.lane.b32.xlu0 %v713, 16
        %v1555 = vpop.permute.xlu0 %1554
        %1556 = vrot.lane.b32.xlu0 %v715, 16
        %v1557 = vpop.permute.xlu0 %1556
        %1558 = vrot.lane.b32.xlu0 %v718, 16
        %v1559 = vpop.permute.xlu0 %1558
        %1560 = vrot.lane.b32.xlu0 %v720, 16
        %v1561 = vpop.permute.xlu0 %1560
        %1562 = vrot.lane.b32.xlu0 %v723, 16
        %v1563 = vpop.permute.xlu0 %1562
        %1564 = vrot.lane.b32.xlu0 %v725, 16
        %v1565 = vpop.permute.xlu0 %1564
        %1566 = vrot.lane.b32.xlu0 %v728, 16
        %v1567 = vpop.permute.xlu0 %1566
        %1568 = vrot.lane.b32.xlu0 %v730, 16
        %v1569 = vpop.permute.xlu0 %1568
        %1570 = vrot.lane.b32.xlu0 %v733, 16
        %v1571 = vpop.permute.xlu0 %1570
        %1572 = vrot.lane.b32.xlu0 %v735, 16
        %v1573 = vpop.permute.xlu0 %1572
        %1574 = vrot.lane.b32.xlu0 %v738, 16
        %v1575 = vpop.permute.xlu0 %1574
        %1576 = vrot.lane.b32.xlu0 %v740, 16
        %v1577 = vpop.permute.xlu0 %1576
        %1578 = vrot.lane.b32.xlu0 %v743, 16
        %v1579 = vpop.permute.xlu0 %1578
        %1580 = vrot.lane.b32.xlu0 %v745, 16
        %v1581 = vpop.permute.xlu0 %1580
        %1582 = vrot.lane.b32.xlu0 %v748, 16
        %v1583 = vpop.permute.xlu0 %1582
        %1584 = vrot.lane.b32.xlu0 %v750, 16
        %v1585 = vpop.permute.xlu0 %1584
        %1586 = vrot.lane.b32.xlu0 %v753, 16
        %v1587 = vpop.permute.xlu0 %1586
        %1588 = vrot.lane.b32.xlu0 %v755, 16
        %v1589 = vpop.permute.xlu0 %1588
        %1590 = vrot.lane.b32.xlu0 %v758, 16
        %v1591 = vpop.permute.xlu0 %1590
        %1592 = vrot.lane.b32.xlu0 %v760, 16
        %v1593 = vpop.permute.xlu0 %1592
        %1626 = vrot.lane.b32.xlu0 %v811, 20
        %v1627 = vpop.permute.xlu0 %1626
        %1628 = vrot.lane.b32.xlu0 %v813, 20
        %v1629 = vpop.permute.xlu0 %1628
        %1630 = vrot.lane.b32.xlu0 %v816, 20
        %v1631 = vpop.permute.xlu0 %1630
        %1632 = vrot.lane.b32.xlu0 %v818, 20
        %v1633 = vpop.permute.xlu0 %1632
        %1634 = vrot.lane.b32.xlu0 %v821, 20
        %v1635 = vpop.permute.xlu0 %1634
        %1636 = vrot.lane.b32.xlu0 %v823, 20
        %v1637 = vpop.permute.xlu0 %1636
        %1638 = vrot.lane.b32.xlu0 %v826, 20
        %v1639 = vpop.permute.xlu0 %1638
        %1640 = vrot.lane.b32.xlu0 %v828, 20
        %v1641 = vpop.permute.xlu0 %1640
        %1642 = vrot.lane.b32.xlu0 %v831, 20
        %v1643 = vpop.permute.xlu0 %1642
        %1644 = vrot.lane.b32.xlu0 %v833, 20
        %v1645 = vpop.permute.xlu0 %1644
        %1646 = vrot.lane.b32.xlu0 %v836, 20
        %v1647 = vpop.permute.xlu0 %1646
        %1648 = vrot.lane.b32.xlu0 %v838, 20
        %v1649 = vpop.permute.xlu0 %1648
        %1650 = vrot.lane.b32.xlu0 %v841, 20
        %v1651 = vpop.permute.xlu0 %1650
        %1652 = vrot.lane.b32.xlu0 %v843, 20
        %v1653 = vpop.permute.xlu0 %1652
        %1654 = vrot.lane.b32.xlu0 %v846, 20
        %v1655 = vpop.permute.xlu0 %1654
        %1656 = vrot.lane.b32.xlu0 %v848, 20
        %v1657 = vpop.permute.xlu0 %1656
        %1658 = vrot.lane.b32.xlu0 %v851, 20
        %v1659 = vpop.permute.xlu0 %1658
        %1660 = vrot.lane.b32.xlu0 %v853, 20
        %v1661 = vpop.permute.xlu0 %1660
        %1662 = vrot.lane.b32.xlu0 %v856, 20
        %v1663 = vpop.permute.xlu0 %1662
        %1664 = vrot.lane.b32.xlu0 %v858, 20
        %v1665 = vpop.permute.xlu0 %1664
        %1666 = vrot.lane.b32.xlu0 %v861, 20
        %v1667 = vpop.permute.xlu0 %1666
        %1668 = vrot.lane.b32.xlu0 %v863, 20
        %v1669 = vpop.permute.xlu0 %1668
        %1670 = vrot.lane.b32.xlu0 %v866, 20
        %v1671 = vpop.permute.xlu0 %1670
        %1672 = vrot.lane.b32.xlu0 %v868, 20
        %v1673 = vpop.permute.xlu0 %1672
        %1674 = vrot.lane.b32.xlu0 %v871, 20
        %v1675 = vpop.permute.xlu0 %1674
        %1676 = vrot.lane.b32.xlu0 %v873, 20
        %v1677 = vpop.permute.xlu0 %1676
        %1678 = vrot.lane.b32.xlu0 %v876, 20
        %v1679 = vpop.permute.xlu0 %1678
        %1680 = vrot.lane.b32.xlu0 %v878, 20
        %v1681 = vpop.permute.xlu0 %1680
        %1682 = vrot.lane.b32.xlu0 %v881, 20
        %v1683 = vpop.permute.xlu0 %1682
        %1684 = vrot.lane.b32.xlu0 %v883, 20
        %v1685 = vpop.permute.xlu0 %1684
        %1686 = vrot.lane.b32.xlu0 %v886, 20
        %v1687 = vpop.permute.xlu0 %1686
        %1688 = vrot.lane.b32.xlu0 %v888, 20
        %v1689 = vpop.permute.xlu0 %1688
        %1722 = vrot.lane.b32.xlu0 %v922, 24
        %v1723 = vpop.permute.xlu0 %1722
        %1724 = vrot.lane.b32.xlu0 %v923, 24
        %v1725 = vpop.permute.xlu0 %1724
        %1726 = vrot.lane.b32.xlu0 %v924, 24
        %v1727 = vpop.permute.xlu0 %1726
        %1728 = vrot.lane.b32.xlu0 %v925, 24
        %v1729 = vpop.permute.xlu0 %1728
        %1730 = vrot.lane.b32.xlu0 %v926, 24
        %v1731 = vpop.permute.xlu0 %1730
        %1732 = vrot.lane.b32.xlu0 %v927, 24
        %v1733 = vpop.permute.xlu0 %1732
        %1734 = vrot.lane.b32.xlu0 %v928, 24
        %v1735 = vpop.permute.xlu0 %1734
        %1736 = vrot.lane.b32.xlu0 %v929, 24
        %v1737 = vpop.permute.xlu0 %1736
        %1738 = vrot.lane.b32.xlu0 %v930, 24
        %v1739 = vpop.permute.xlu0 %1738
        %1740 = vrot.lane.b32.xlu0 %v931, 24
        %v1741 = vpop.permute.xlu0 %1740
        %1742 = vrot.lane.b32.xlu0 %v932, 24
        %v1743 = vpop.permute.xlu0 %1742
        %1744 = vrot.lane.b32.xlu0 %v933, 24
        %v1745 = vpop.permute.xlu0 %1744
        %1746 = vrot.lane.b32.xlu0 %v934, 24
        %v1747 = vpop.permute.xlu0 %1746
        %1748 = vrot.lane.b32.xlu0 %v935, 24
        %v1749 = vpop.permute.xlu0 %1748
        %1750 = vrot.lane.b32.xlu0 %v936, 24
        %v1751 = vpop.permute.xlu0 %1750
        %1752 = vrot.lane.b32.xlu0 %v937, 24
        %v1753 = vpop.permute.xlu0 %1752
        %1754 = vrot.lane.b32.xlu0 %v938, 24
        %v1755 = vpop.permute.xlu0 %1754
        %1756 = vrot.lane.b32.xlu0 %v939, 24
        %v1757 = vpop.permute.xlu0 %1756
        %1758 = vrot.lane.b32.xlu0 %v940, 24
        %v1759 = vpop.permute.xlu0 %1758
        %1760 = vrot.lane.b32.xlu0 %v941, 24
        %v1761 = vpop.permute.xlu0 %1760
        %1762 = vrot.lane.b32.xlu0 %v942, 24
        %v1763 = vpop.permute.xlu0 %1762
        %1764 = vrot.lane.b32.xlu0 %v943, 24
        %v1765 = vpop.permute.xlu0 %1764
        %1766 = vrot.lane.b32.xlu0 %v944, 24
        %v1767 = vpop.permute.xlu0 %1766
        %1768 = vrot.lane.b32.xlu0 %v945, 24
        %v1769 = vpop.permute.xlu0 %1768
        %1770 = vrot.lane.b32.xlu0 %v946, 24
        %v1771 = vpop.permute.xlu0 %1770
        %1772 = vrot.lane.b32.xlu0 %v947, 24
        %v1773 = vpop.permute.xlu0 %1772
        %1774 = vrot.lane.b32.xlu0 %v948, 24
        %v1775 = vpop.permute.xlu0 %1774
        %1776 = vrot.lane.b32.xlu0 %v949, 24
        %v1777 = vpop.permute.xlu0 %1776
        %1778 = vrot.lane.b32.xlu0 %v950, 24
        %v1779 = vpop.permute.xlu0 %1778
        %1780 = vrot.lane.b32.xlu0 %v951, 24
        %v1781 = vpop.permute.xlu0 %1780
        %1782 = vrot.lane.b32.xlu0 %v952, 24
        %v1783 = vpop.permute.xlu0 %1782
        %1784 = vrot.lane.b32.xlu0 %v953, 24
        %v1785 = vpop.permute.xlu0 %1784
        %1818 = vrot.lane.b32.xlu0 %v1036, 28
        %v1819 = vpop.permute.xlu0 %1818
        %1820 = vrot.lane.b32.xlu0 %v1038, 28
        %v1821 = vpop.permute.xlu0 %1820
        %1822 = vrot.lane.b32.xlu0 %v1041, 28
        %v1823 = vpop.permute.xlu0 %1822
        %1824 = vrot.lane.b32.xlu0 %v1043, 28
        %v1825 = vpop.permute.xlu0 %1824
        %1826 = vrot.lane.b32.xlu0 %v1046, 28
        %v1827 = vpop.permute.xlu0 %1826
        %1828 = vrot.lane.b32.xlu0 %v1048, 28
        %v1829 = vpop.permute.xlu0 %1828
        %1830 = vrot.lane.b32.xlu0 %v1051, 28
        %v1831 = vpop.permute.xlu0 %1830
        %1832 = vrot.lane.b32.xlu0 %v1053, 28
        %v1833 = vpop.permute.xlu0 %1832
        %1834 = vrot.lane.b32.xlu0 %v1056, 28
        %v1835 = vpop.permute.xlu0 %1834
        %1836 = vrot.lane.b32.xlu0 %v1058, 28
        %v1837 = vpop.permute.xlu0 %1836
        %1838 = vrot.lane.b32.xlu0 %v1061, 28
        %v1839 = vpop.permute.xlu0 %1838
        %1840 = vrot.lane.b32.xlu0 %v1063, 28
        %v1841 = vpop.permute.xlu0 %1840
        %1842 = vrot.lane.b32.xlu0 %v1066, 28
        %v1843 = vpop.permute.xlu0 %1842
        %1844 = vrot.lane.b32.xlu0 %v1068, 28
        %v1845 = vpop.permute.xlu0 %1844
        %1846 = vrot.lane.b32.xlu0 %v1071, 28
        %v1847 = vpop.permute.xlu0 %1846
        %1848 = vrot.lane.b32.xlu0 %v1073, 28
        %v1849 = vpop.permute.xlu0 %1848
        %1850 = vrot.lane.b32.xlu0 %v1076, 28
        %v1851 = vpop.permute.xlu0 %1850
        %1852 = vrot.lane.b32.xlu0 %v1078, 28
        %v1853 = vpop.permute.xlu0 %1852
        %1854 = vrot.lane.b32.xlu0 %v1081, 28
        %v1855 = vpop.permute.xlu0 %1854
        %1856 = vrot.lane.b32.xlu0 %v1083, 28
        %v1857 = vpop.permute.xlu0 %1856
        %1858 = vrot.lane.b32.xlu0 %v1086, 28
        %v1859 = vpop.permute.xlu0 %1858
        %1860 = vrot.lane.b32.xlu0 %v1088, 28
        %v1861 = vpop.permute.xlu0 %1860
        %1862 = vrot.lane.b32.xlu0 %v1091, 28
        %v1863 = vpop.permute.xlu0 %1862
        %1864 = vrot.lane.b32.xlu0 %v1093, 28
        %v1865 = vpop.permute.xlu0 %1864
        %1866 = vrot.lane.b32.xlu0 %v1096, 28
        %v1867 = vpop.permute.xlu0 %1866
        %1868 = vrot.lane.b32.xlu0 %v1098, 28
        %v1869 = vpop.permute.xlu0 %1868
        %1870 = vrot.lane.b32.xlu0 %v1101, 28
        %v1871 = vpop.permute.xlu0 %1870
        %1872 = vrot.lane.b32.xlu0 %v1103, 28
        %v1873 = vpop.permute.xlu0 %1872
        %1874 = vrot.lane.b32.xlu0 %v1106, 28
        %v1875 = vpop.permute.xlu0 %1874
        %1876 = vrot.lane.b32.xlu0 %v1108, 28
        %v1877 = vpop.permute.xlu0 %1876
        %1878 = vrot.lane.b32.xlu0 %v1111, 28
        %v1879 = vpop.permute.xlu0 %1878
        %1880 = vrot.lane.b32.xlu0 %v1113, 28
        %v1881 = vpop.permute.xlu0 %1880
        %1914 = vrot.lane.b32.xlu0 %v1164, 32
        %v1915 = vpop.permute.xlu0 %1914
        %1916 = vrot.lane.b32.xlu0 %v1166, 32
        %v1917 = vpop.permute.xlu0 %1916
        %1918 = vrot.lane.b32.xlu0 %v1169, 32
        %v1919 = vpop.permute.xlu0 %1918
        %1920 = vrot.lane.b32.xlu0 %v1171, 32
        %v1921 = vpop.permute.xlu0 %1920
        %1922 = vrot.lane.b32.xlu0 %v1174, 32
        %v1923 = vpop.permute.xlu0 %1922
        %1924 = vrot.lane.b32.xlu0 %v1176, 32
        %v1925 = vpop.permute.xlu0 %1924
        %1926 = vrot.lane.b32.xlu0 %v1179, 32
        %v1927 = vpop.permute.xlu0 %1926
        %1928 = vrot.lane.b32.xlu0 %v1181, 32
        %v1929 = vpop.permute.xlu0 %1928
        %1930 = vrot.lane.b32.xlu0 %v1184, 32
        %v1931 = vpop.permute.xlu0 %1930
        %1932 = vrot.lane.b32.xlu0 %v1186, 32
        %v1933 = vpop.permute.xlu0 %1932
        %1934 = vrot.lane.b32.xlu0 %v1189, 32
        %v1935 = vpop.permute.xlu0 %1934
        %1936 = vrot.lane.b32.xlu0 %v1191, 32
        %v1937 = vpop.permute.xlu0 %1936
        %1938 = vrot.lane.b32.xlu0 %v1194, 32
        %v1939 = vpop.permute.xlu0 %1938
        %1940 = vrot.lane.b32.xlu0 %v1196, 32
        %v1941 = vpop.permute.xlu0 %1940
        %1942 = vrot.lane.b32.xlu0 %v1199, 32
        %v1943 = vpop.permute.xlu0 %1942
        %1944 = vrot.lane.b32.xlu0 %v1201, 32
        %v1945 = vpop.permute.xlu0 %1944
        %1946 = vrot.lane.b32.xlu0 %v1204, 32
        %v1947 = vpop.permute.xlu0 %1946
        %1948 = vrot.lane.b32.xlu0 %v1206, 32
        %v1949 = vpop.permute.xlu0 %1948
        %1950 = vrot.lane.b32.xlu0 %v1209, 32
        %v1951 = vpop.permute.xlu0 %1950
        %1952 = vrot.lane.b32.xlu0 %v1211, 32
        %v1953 = vpop.permute.xlu0 %1952
        %1954 = vrot.lane.b32.xlu0 %v1214, 32
        %v1955 = vpop.permute.xlu0 %1954
        %1956 = vrot.lane.b32.xlu0 %v1216, 32
        %v1957 = vpop.permute.xlu0 %1956
        %1958 = vrot.lane.b32.xlu0 %v1219, 32
        %v1959 = vpop.permute.xlu0 %1958
        %1960 = vrot.lane.b32.xlu0 %v1221, 32
        %v1961 = vpop.permute.xlu0 %1960
        %1962 = vrot.lane.b32.xlu0 %v1224, 32
        %v1963 = vpop.permute.xlu0 %1962
        %1964 = vrot.lane.b32.xlu0 %v1226, 32
        %v1965 = vpop.permute.xlu0 %1964
        %1966 = vrot.lane.b32.xlu0 %v1229, 32
        %v1967 = vpop.permute.xlu0 %1966
        %1968 = vrot.lane.b32.xlu0 %v1231, 32
        %v1969 = vpop.permute.xlu0 %1968
        %1970 = vrot.lane.b32.xlu0 %v1234, 32
        %v1971 = vpop.permute.xlu0 %1970
        %1972 = vrot.lane.b32.xlu0 %v1236, 32
        %v1973 = vpop.permute.xlu0 %1972
        %1974 = vrot.lane.b32.xlu0 %v1239, 32
        %v1975 = vpop.permute.xlu0 %1974
        %1976 = vrot.lane.b32.xlu0 %v1241, 32
        %v1977 = vpop.permute.xlu0 %1976
        %vm2010 = vcmask 31744
        %v2011 = vsel %vm2010, %v214, %v1243
        %v2012 = vsel %vm2010, %v215, %v1245
        %v2013 = vsel %vm2010, %v216, %v1247
        %v2014 = vsel %vm2010, %v217, %v1249
        %v2015 = vsel %vm2010, %v218, %v1251
        %v2016 = vsel %vm2010, %v219, %v1253
        %v2017 = vsel %vm2010, %v220, %v1255
        %v2018 = vsel %vm2010, %v221, %v1257
        %v2019 = vsel %vm2010, %v222, %v1259
        %v2020 = vsel %vm2010, %v223, %v1261
        %v2021 = vsel %vm2010, %v224, %v1263
        %v2022 = vsel %vm2010, %v225, %v1265
        %v2023 = vsel %vm2010, %v226, %v1267
        %v2024 = vsel %vm2010, %v227, %v1269
        %v2025 = vsel %vm2010, %v228, %v1271
        %v2026 = vsel %vm2010, %v229, %v1273
        %v2027 = vsel %vm2010, %v230, %v1275
        %v2028 = vsel %vm2010, %v231, %v1277
        %v2029 = vsel %vm2010, %v232, %v1279
        %v2030 = vsel %vm2010, %v233, %v1281
        %v2031 = vsel %vm2010, %v234, %v1283
        %v2032 = vsel %vm2010, %v235, %v1285
        %v2033 = vsel %vm2010, %v236, %v1287
        %v2034 = vsel %vm2010, %v237, %v1289
        %v2035 = vsel %vm2010, %v238, %v1291
        %v2036 = vsel %vm2010, %v239, %v1293
        %v2037 = vsel %vm2010, %v240, %v1295
        %v2038 = vsel %vm2010, %v241, %v1297
        %v2039 = vsel %vm2010, %v242, %v1299
        %v2040 = vsel %vm2010, %v243, %v1301
        %v2041 = vsel %vm2010, %v244, %v1303
        %v2042 = vsel %vm2010, %v245, %v1305
        %vm2043 = vcmask 64512
        %v2044 = vsel %vm2043, %v2011, %v1339
        %v2045 = vsel %vm2043, %v2012, %v1341
        %v2046 = vsel %vm2043, %v2013, %v1343
        %v2047 = vsel %vm2043, %v2014, %v1345
        %v2048 = vsel %vm2043, %v2015, %v1347
        %v2049 = vsel %vm2043, %v2016, %v1349
        %v2050 = vsel %vm2043, %v2017, %v1351
        %v2051 = vsel %vm2043, %v2018, %v1353
        %v2052 = vsel %vm2043, %v2019, %v1355
        %v2053 = vsel %vm2043, %v2020, %v1357
        %v2054 = vsel %vm2043, %v2021, %v1359
        %v2055 = vsel %vm2043, %v2022, %v1361
        %v2056 = vsel %vm2043, %v2023, %v1363
        %v2057 = vsel %vm2043, %v2024, %v1365
        %v2058 = vsel %vm2043, %v2025, %v1367
        %v2059 = vsel %vm2043, %v2026, %v1369
        %v2060 = vsel %vm2043, %v2027, %v1371
        %v2061 = vsel %vm2043, %v2028, %v1373
        %v2062 = vsel %vm2043, %v2029, %v1375
        %v2063 = vsel %vm2043, %v2030, %v1377
        %v2064 = vsel %vm2043, %v2031, %v1379
        %v2065 = vsel %vm2043, %v2032, %v1381
        %v2066 = vsel %vm2043, %v2033, %v1383
        %v2067 = vsel %vm2043, %v2034, %v1385
        %v2068 = vsel %vm2043, %v2035, %v1387
        %v2069 = vsel %vm2043, %v2036, %v1389
        %v2070 = vsel %vm2043, %v2037, %v1391
        %v2071 = vsel %vm2043, %v2038, %v1393
        %v2072 = vsel %vm2043, %v2039, %v1395
        %v2073 = vsel %vm2043, %v2040, %v1397
        %v2074 = vsel %vm2043, %v2041, %v1399
        %v2075 = vsel %vm2043, %v2042, %v1401
        %vm2076 = vcmask 97280
        %v2077 = vsel %vm2076, %v2044, %v1435
        %v2078 = vsel %vm2076, %v2045, %v1437
        %v2079 = vsel %vm2076, %v2046, %v1439
        %v2080 = vsel %vm2076, %v2047, %v1441
        %v2081 = vsel %vm2076, %v2048, %v1443
        %v2082 = vsel %vm2076, %v2049, %v1445
        %v2083 = vsel %vm2076, %v2050, %v1447
        %v2084 = vsel %vm2076, %v2051, %v1449
        %v2085 = vsel %vm2076, %v2052, %v1451
        %v2086 = vsel %vm2076, %v2053, %v1453
        %v2087 = vsel %vm2076, %v2054, %v1455
        %v2088 = vsel %vm2076, %v2055, %v1457
        %v2089 = vsel %vm2076, %v2056, %v1459
        %v2090 = vsel %vm2076, %v2057, %v1461
        %v2091 = vsel %vm2076, %v2058, %v1463
        %v2092 = vsel %vm2076, %v2059, %v1465
        %v2093 = vsel %vm2076, %v2060, %v1467
        %v2094 = vsel %vm2076, %v2061, %v1469
        %v2095 = vsel %vm2076, %v2062, %v1471
        %v2096 = vsel %vm2076, %v2063, %v1473
        %v2097 = vsel %vm2076, %v2064, %v1475
        %v2098 = vsel %vm2076, %v2065, %v1477
        %v2099 = vsel %vm2076, %v2066, %v1479
        %v2100 = vsel %vm2076, %v2067, %v1481
        %v2101 = vsel %vm2076, %v2068, %v1483
        %v2102 = vsel %vm2076, %v2069, %v1485
        %v2103 = vsel %vm2076, %v2070, %v1487
        %v2104 = vsel %vm2076, %v2071, %v1489
        %v2105 = vsel %vm2076, %v2072, %v1491
        %v2106 = vsel %vm2076, %v2073, %v1493
        %v2107 = vsel %vm2076, %v2074, %v1495
        %v2108 = vsel %vm2076, %v2075, %v1497
        %vm2109 = vcmask 130048
        %v2110 = vsel %vm2109, %v2077, %v1531
        %v2111 = vsel %vm2109, %v2078, %v1533
        %v2112 = vsel %vm2109, %v2079, %v1535
        %v2113 = vsel %vm2109, %v2080, %v1537
        %v2114 = vsel %vm2109, %v2081, %v1539
        %v2115 = vsel %vm2109, %v2082, %v1541
        %v2116 = vsel %vm2109, %v2083, %v1543
        %v2117 = vsel %vm2109, %v2084, %v1545
        %v2118 = vsel %vm2109, %v2085, %v1547
        %v2119 = vsel %vm2109, %v2086, %v1549
        %v2120 = vsel %vm2109, %v2087, %v1551
        %v2121 = vsel %vm2109, %v2088, %v1553
        %v2122 = vsel %vm2109, %v2089, %v1555
        %v2123 = vsel %vm2109, %v2090, %v1557
        %v2124 = vsel %vm2109, %v2091, %v1559
        %v2125 = vsel %vm2109, %v2092, %v1561
        %v2126 = vsel %vm2109, %v2093, %v1563
        %v2127 = vsel %vm2109, %v2094, %v1565
        %v2128 = vsel %vm2109, %v2095, %v1567
        %v2129 = vsel %vm2109, %v2096, %v1569
        %v2130 = vsel %vm2109, %v2097, %v1571
        %v2131 = vsel %vm2109, %v2098, %v1573
        %v2132 = vsel %vm2109, %v2099, %v1575
        %v2133 = vsel %vm2109, %v2100, %v1577
        %v2134 = vsel %vm2109, %v2101, %v1579
        %v2135 = vsel %vm2109, %v2102, %v1581
        %v2136 = vsel %vm2109, %v2103, %v1583
        %v2137 = vsel %vm2109, %v2104, %v1585
        %v2138 = vsel %vm2109, %v2105, %v1587
        %v2139 = vsel %vm2109, %v2106, %v1589
        %v2140 = vsel %vm2109, %v2107, %v1591
        %v2141 = vsel %vm2109, %v2108, %v1593
        %vm2142 = vcmask 162816
        %v2143 = vsel %vm2142, %v2110, %v1627
        %v2144 = vsel %vm2142, %v2111, %v1629
        %v2145 = vsel %vm2142, %v2112, %v1631
        %v2146 = vsel %vm2142, %v2113, %v1633
        %v2147 = vsel %vm2142, %v2114, %v1635
        %v2148 = vsel %vm2142, %v2115, %v1637
        %v2149 = vsel %vm2142, %v2116, %v1639
        %v2150 = vsel %vm2142, %v2117, %v1641
        %v2151 = vsel %vm2142, %v2118, %v1643
        %v2152 = vsel %vm2142, %v2119, %v1645
        %v2153 = vsel %vm2142, %v2120, %v1647
        %v2154 = vsel %vm2142, %v2121, %v1649
        %v2155 = vsel %vm2142, %v2122, %v1651
        %v2156 = vsel %vm2142, %v2123, %v1653
        %v2157 = vsel %vm2142, %v2124, %v1655
        %v2158 = vsel %vm2142, %v2125, %v1657
        %v2159 = vsel %vm2142, %v2126, %v1659
        %v2160 = vsel %vm2142, %v2127, %v1661
        %v2161 = vsel %vm2142, %v2128, %v1663
        %v2162 = vsel %vm2142, %v2129, %v1665
        %v2163 = vsel %vm2142, %v2130, %v1667
        %v2164 = vsel %vm2142, %v2131, %v1669
        %v2165 = vsel %vm2142, %v2132, %v1671
        %v2166 = vsel %vm2142, %v2133, %v1673
        %v2167 = vsel %vm2142, %v2134, %v1675
        %v2168 = vsel %vm2142, %v2135, %v1677
        %v2169 = vsel %vm2142, %v2136, %v1679
        %v2170 = vsel %vm2142, %v2137, %v1681
        %v2171 = vsel %vm2142, %v2138, %v1683
        %v2172 = vsel %vm2142, %v2139, %v1685
        %v2173 = vsel %vm2142, %v2140, %v1687
        %v2174 = vsel %vm2142, %v2141, %v1689
        %vm2175 = vcmask 195584
        %v2176 = vsel %vm2175, %v2143, %v1723
        %v2177 = vsel %vm2175, %v2144, %v1725
        %v2178 = vsel %vm2175, %v2145, %v1727
        %v2179 = vsel %vm2175, %v2146, %v1729
        %v2180 = vsel %vm2175, %v2147, %v1731
        %v2181 = vsel %vm2175, %v2148, %v1733
        %v2182 = vsel %vm2175, %v2149, %v1735
        %v2183 = vsel %vm2175, %v2150, %v1737
        %v2184 = vsel %vm2175, %v2151, %v1739
        %v2185 = vsel %vm2175, %v2152, %v1741
        %v2186 = vsel %vm2175, %v2153, %v1743
        %v2187 = vsel %vm2175, %v2154, %v1745
        %v2188 = vsel %vm2175, %v2155, %v1747
        %v2189 = vsel %vm2175, %v2156, %v1749
        %v2190 = vsel %vm2175, %v2157, %v1751
        %v2191 = vsel %vm2175, %v2158, %v1753
        %v2192 = vsel %vm2175, %v2159, %v1755
        %v2193 = vsel %vm2175, %v2160, %v1757
        %v2194 = vsel %vm2175, %v2161, %v1759
        %v2195 = vsel %vm2175, %v2162, %v1761
        %v2196 = vsel %vm2175, %v2163, %v1763
        %v2197 = vsel %vm2175, %v2164, %v1765
        %v2198 = vsel %vm2175, %v2165, %v1767
        %v2199 = vsel %vm2175, %v2166, %v1769
        %v2200 = vsel %vm2175, %v2167, %v1771
        %v2201 = vsel %vm2175, %v2168, %v1773
        %v2202 = vsel %vm2175, %v2169, %v1775
        %v2203 = vsel %vm2175, %v2170, %v1777
        %v2204 = vsel %vm2175, %v2171, %v1779
        %v2205 = vsel %vm2175, %v2172, %v1781
        %v2206 = vsel %vm2175, %v2173, %v1783
        %v2207 = vsel %vm2175, %v2174, %v1785
        %vm2208 = vcmask 228352
        %v2209 = vsel %vm2208, %v2176, %v1819
        %v2210 = vsel %vm2208, %v2177, %v1821
        %v2211 = vsel %vm2208, %v2178, %v1823
        %v2212 = vsel %vm2208, %v2179, %v1825
        %v2213 = vsel %vm2208, %v2180, %v1827
        %v2214 = vsel %vm2208, %v2181, %v1829
        %v2215 = vsel %vm2208, %v2182, %v1831
        %v2216 = vsel %vm2208, %v2183, %v1833
        %v2217 = vsel %vm2208, %v2184, %v1835
        %v2218 = vsel %vm2208, %v2185, %v1837
        %v2219 = vsel %vm2208, %v2186, %v1839
        %v2220 = vsel %vm2208, %v2187, %v1841
        %v2221 = vsel %vm2208, %v2188, %v1843
        %v2222 = vsel %vm2208, %v2189, %v1845
        %v2223 = vsel %vm2208, %v2190, %v1847
        %v2224 = vsel %vm2208, %v2191, %v1849
        %v2225 = vsel %vm2208, %v2192, %v1851
        %v2226 = vsel %vm2208, %v2193, %v1853
        %v2227 = vsel %vm2208, %v2194, %v1855
        %v2228 = vsel %vm2208, %v2195, %v1857
        %v2229 = vsel %vm2208, %v2196, %v1859
        %v2230 = vsel %vm2208, %v2197, %v1861
        %v2231 = vsel %vm2208, %v2198, %v1863
        %v2232 = vsel %vm2208, %v2199, %v1865
        %v2233 = vsel %vm2208, %v2200, %v1867
        %v2234 = vsel %vm2208, %v2201, %v1869
        %v2235 = vsel %vm2208, %v2202, %v1871
        %v2236 = vsel %vm2208, %v2203, %v1873
        %v2237 = vsel %vm2208, %v2204, %v1875
        %v2238 = vsel %vm2208, %v2205, %v1877
        %v2239 = vsel %vm2208, %v2206, %v1879
        %v2240 = vsel %vm2208, %v2207, %v1881
        %vm2241 = vcmask 261120
        %v2242 = vsel %vm2241, %v2209, %v1915
        %v2243 = vsel %vm2241, %v2210, %v1917
        %v2244 = vsel %vm2241, %v2211, %v1919
        %v2245 = vsel %vm2241, %v2212, %v1921
        %v2246 = vsel %vm2241, %v2213, %v1923
        %v2247 = vsel %vm2241, %v2214, %v1925
        %v2248 = vsel %vm2241, %v2215, %v1927
        %v2249 = vsel %vm2241, %v2216, %v1929
        %v2250 = vsel %vm2241, %v2217, %v1931
        %v2251 = vsel %vm2241, %v2218, %v1933
        %v2252 = vsel %vm2241, %v2219, %v1935
        %v2253 = vsel %vm2241, %v2220, %v1937
        %v2254 = vsel %vm2241, %v2221, %v1939
        %v2255 = vsel %vm2241, %v2222, %v1941
        %v2256 = vsel %vm2241, %v2223, %v1943
        %v2257 = vsel %vm2241, %v2224, %v1945
        %v2258 = vsel %vm2241, %v2225, %v1947
        %v2259 = vsel %vm2241, %v2226, %v1949
        %v2260 = vsel %vm2241, %v2227, %v1951
        %v2261 = vsel %vm2241, %v2228, %v1953
        %v2262 = vsel %vm2241, %v2229, %v1955
        %v2263 = vsel %vm2241, %v2230, %v1957
        %v2264 = vsel %vm2241, %v2231, %v1959
        %v2265 = vsel %vm2241, %v2232, %v1961
        %v2266 = vsel %vm2241, %v2233, %v1963
        %v2267 = vsel %vm2241, %v2234, %v1965
        %v2268 = vsel %vm2241, %v2235, %v1967
        %v2269 = vsel %vm2241, %v2236, %v1969
        %v2270 = vsel %vm2241, %v2237, %v1971
        %v2271 = vsel %vm2241, %v2238, %v1973
        %v2272 = vsel %vm2241, %v2239, %v1975
        %v2273 = vsel %vm2241, %v2240, %v1977
        %v2274 = vpack.c.bf16 %v2243, %v2242
        %v2275 = vpack.c.bf16 %v2245, %v2244
        %v2276 = vpack.c.bf16 %v2247, %v2246
        %v2277 = vpack.c.bf16 %v2249, %v2248
        %v2278 = vpack.c.bf16 %v2251, %v2250
        %v2279 = vpack.c.bf16 %v2253, %v2252
        %v2280 = vpack.c.bf16 %v2255, %v2254
        %v2281 = vpack.c.bf16 %v2257, %v2256
        %v2282 = vpack.c.bf16 %v2259, %v2258
        %v2283 = vpack.c.bf16 %v2261, %v2260
        %v2284 = vpack.c.bf16 %v2263, %v2262
        %v2285 = vpack.c.bf16 %v2265, %v2264
        %v2286 = vpack.c.bf16 %v2267, %v2266
        %v2287 = vpack.c.bf16 %v2269, %v2268
        %v2288 = vpack.c.bf16 %v2271, %v2270
        %v2289 = vpack.c.bf16 %v2273, %v2272
        %v2290 = vld [vmem:[%s1] sm:$0xf]
        %v2291 = vld [vmem:[%s1 + $0x4] sm:$0xf]
        %v2292 = vld [vmem:[%s1 + $0x8] sm:$0xf]
        %v2293 = vld [vmem:[%s1 + $0xc] sm:$0xf]
        %v2294 = vld [vmem:[%s1 + $0x10] sm:$0x3]
        %v2300 = vunpack.c.l.b16 %v2290
        %v2301 = vunpack.c.l.b16 %v2291
        %v2302 = vunpack.c.l.b16 %v2292
        %v2303 = vunpack.c.l.b16 %v2293
        %v2304 = vunpack.c.l.b16 %v2294
        %v2305 = vpack.c.b16 %v2301, %v2300
        %v2306 = vpack.c.b16 %v2303, %v2302
        %v2307 = vpack.c.b16 %v2304, %v2304
        %vm2310 = vcmask 293888
        %v2312 = vsel %vm2310, %v2274, 0
        %v2315 = vsel %vm2310, %v2275, 0
        %v2318 = vsel %vm2310, %v2276, 0
        %v2321 = vsel %vm2310, %v2277, 0
        %v2324 = vsel %vm2310, %v2278, 0
        %v2327 = vsel %vm2310, %v2279, 0
        %v2330 = vsel %vm2310, %v2280, 0
        %v2333 = vsel %vm2310, %v2281, 0
        %v2336 = vsel %vm2310, %v2282, 0
        %v2339 = vsel %vm2310, %v2283, 0
        %v2342 = vsel %vm2310, %v2284, 0
        %v2345 = vsel %vm2310, %v2285, 0
        %v2348 = vsel %vm2310, %v2286, 0
        %v2351 = vsel %vm2310, %v2287, 0
        %v2354 = vsel %vm2310, %v2288, 0
        %v2357 = vsel %vm2310, %v2289, 0
        %vm2359 = vcmask 1041408
        %v2361 = vsel %vm2359, %v2307, 0
        %2363 = vmatprep.subr.bf16.mxu0 0
        %2364 = vmatpush1.bf16.msra.mxu0 %v2305
        %2365 = vmatprep.subr.bf16.mxu0 0
        %2366 = vmatpush1.bf16.msra.mxu0 %v2306
        %2367 = vmatprep.subr.bf16.mxu0 0
        %2368 = vmatpush1.bf16.msra.mxu0 %v2361
        %2369 = vmatprep.subr.bf16.mxu0 0
        %2370 = vmatpush1.bf16.msra.mxu0 0
        %2371 = vmatprep.subr.bf16.mxu0 0
        %2372 = vmatpush1.bf16.msra.mxu0 0
        %2373 = vmatprep.subr.bf16.mxu0 0
        %2374 = vmatpush1.bf16.msra.mxu0 0
        %2375 = vmatprep.subr.bf16.mxu0 0
        %2376 = vmatpush1.bf16.msra.mxu0 0
        %2377 = vmatprep.subr.bf16.mxu0 0
        %2378 = vmatpush1.bf16.msra.mxu0 0
        %2379 = vmatprep.subr.bf16.mxu0 0
        %2380 = vmatpush1.bf16.msra.mxu0 0
        %2381 = vmatprep.subr.bf16.mxu0 0
        %2382 = vmatpush1.bf16.msra.mxu0 0
        %2383 = vmatprep.subr.bf16.mxu0 0
        %2384 = vmatpush1.bf16.msra.mxu0 0
        %2385 = vmatprep.subr.bf16.mxu0 0
        %2386 = vmatpush1.bf16.msra.mxu0 0
        %2387 = vmatprep.subr.bf16.mxu0 0
        %2388 = vmatpush1.bf16.msra.mxu0 0
        %2389 = vmatprep.subr.bf16.mxu0 0
        %2390 = vmatpush1.bf16.msra.mxu0 0
        %2391 = vmatprep.subr.bf16.mxu0 0
        %2392 = vmatpush1.bf16.msra.mxu0 0
        %2393 = vmatprep.subr.bf16.mxu0 0
        %2394 = vmatpush1.bf16.msra.mxu0 0
        %2395 = vmatprep.mubr.bf16.mxu0 0
        %2396 = vmatmul.mubr.bf16.gmra.mrb[0].mxu0 %v2312
        %v2397 = vpop.f32.mrb[0].mxu0
        %v2398 = vadd.f32 0.0, %v2397
        %v2399 = vpop.f32.mrb[0].mxu0
        %v2400 = vpop.f32.mrb[0].mxu0
        %v2401 = vadd.f32 0.0, %v2400
        %v2402 = vpop.f32.mrb[0].mxu0
        %2403 = vmatprep.mubr.bf16.mxu0 0
        %2404 = vmatmul.mubr.bf16.gmra.mrb[0].mxu0 %v2315
        %v2405 = vpop.f32.mrb[0].mxu0
        %v2406 = vadd.f32 0.0, %v2405
        %v2407 = vpop.f32.mrb[0].mxu0
        %v2408 = vpop.f32.mrb[0].mxu0
        %v2409 = vadd.f32 0.0, %v2408
        %v2410 = vpop.f32.mrb[0].mxu0
        %2411 = vmatprep.mubr.bf16.mxu0 0
        %2412 = vmatmul.mubr.bf16.gmra.mrb[0].mxu0 %v2318
        %v2413 = vpop.f32.mrb[0].mxu0
        %v2414 = vadd.f32 0.0, %v2413
        %v2415 = vpop.f32.mrb[0].mxu0
        %v2416 = vpop.f32.mrb[0].mxu0
        %v2417 = vadd.f32 0.0, %v2416
        %v2418 = vpop.f32.mrb[0].mxu0
        %2419 = vmatprep.mubr.bf16.mxu0 0
        %2420 = vmatmul.mubr.bf16.gmra.mrb[0].mxu0 %v2321
        %v2421 = vpop.f32.mrb[0].mxu0
        %v2422 = vadd.f32 0.0, %v2421
        %v2423 = vpop.f32.mrb[0].mxu0
        %v2424 = vpop.f32.mrb[0].mxu0
        %v2425 = vadd.f32 0.0, %v2424
        %v2426 = vpop.f32.mrb[0].mxu0
        %2427 = vmatprep.mubr.bf16.mxu0 0
        %2428 = vmatmul.mubr.bf16.gmra.mrb[0].mxu0 %v2324
        %v2429 = vpop.f32.mrb[0].mxu0
        %v2430 = vadd.f32 0.0, %v2429
        %v2431 = vpop.f32.mrb[0].mxu0
        %v2432 = vpop.f32.mrb[0].mxu0
        %v2433 = vadd.f32 0.0, %v2432
        %v2434 = vpop.f32.mrb[0].mxu0
        %2435 = vmatprep.mubr.bf16.mxu0 0
        %2436 = vmatmul.mubr.bf16.gmra.mrb[0].mxu0 %v2327
        %v2437 = vpop.f32.mrb[0].mxu0
        %v2438 = vadd.f32 0.0, %v2437
        %v2439 = vpop.f32.mrb[0].mxu0
        %v2440 = vpop.f32.mrb[0].mxu0
        %v2441 = vadd.f32 0.0, %v2440
        %v2442 = vpop.f32.mrb[0].mxu0
        %2443 = vmatprep.mubr.bf16.mxu0 0
        %2444 = vmatmul.mubr.bf16.gmra.mrb[0].mxu0 %v2330
        %v2445 = vpop.f32.mrb[0].mxu0
        %v2446 = vadd.f32 0.0, %v2445
        %v2447 = vpop.f32.mrb[0].mxu0
        %v2448 = vpop.f32.mrb[0].mxu0
        %v2449 = vadd.f32 0.0, %v2448
        %v2450 = vpop.f32.mrb[0].mxu0
        %2451 = vmatprep.mubr.bf16.mxu0 0
        %2452 = vmatmul.mubr.bf16.gmra.mrb[0].mxu0 %v2333
        %v2453 = vpop.f32.mrb[0].mxu0
        %v2454 = vadd.f32 0.0, %v2453
        %v2455 = vpop.f32.mrb[0].mxu0
        %v2456 = vpop.f32.mrb[0].mxu0
        %v2457 = vadd.f32 0.0, %v2456
        %v2458 = vpop.f32.mrb[0].mxu0
        %2459 = vmatprep.mubr.bf16.mxu0 0
        %2460 = vmatmul.mubr.bf16.gmra.mrb[0].mxu0 %v2336
        %v2461 = vpop.f32.mrb[0].mxu0
        %v2462 = vadd.f32 0.0, %v2461
        %v2463 = vpop.f32.mrb[0].mxu0
        %v2464 = vpop.f32.mrb[0].mxu0
        %v2465 = vadd.f32 0.0, %v2464
        %v2466 = vpop.f32.mrb[0].mxu0
        %2467 = vmatprep.mubr.bf16.mxu0 0
        %2468 = vmatmul.mubr.bf16.gmra.mrb[0].mxu0 %v2339
        %v2469 = vpop.f32.mrb[0].mxu0
        %v2470 = vadd.f32 0.0, %v2469
        %v2471 = vpop.f32.mrb[0].mxu0
        %v2472 = vpop.f32.mrb[0].mxu0
        %v2473 = vadd.f32 0.0, %v2472
        %v2474 = vpop.f32.mrb[0].mxu0
        %2475 = vmatprep.mubr.bf16.mxu0 0
        %2476 = vmatmul.mubr.bf16.gmra.mrb[0].mxu0 %v2342
        %v2477 = vpop.f32.mrb[0].mxu0
        %v2478 = vadd.f32 0.0, %v2477
        %v2479 = vpop.f32.mrb[0].mxu0
        %v2480 = vpop.f32.mrb[0].mxu0
        %v2481 = vadd.f32 0.0, %v2480
        %v2482 = vpop.f32.mrb[0].mxu0
        %2483 = vmatprep.mubr.bf16.mxu0 0
        %2484 = vmatmul.mubr.bf16.gmra.mrb[0].mxu0 %v2345
        %v2485 = vpop.f32.mrb[0].mxu0
        %v2486 = vadd.f32 0.0, %v2485
        %v2487 = vpop.f32.mrb[0].mxu0
        %v2488 = vpop.f32.mrb[0].mxu0
        %v2489 = vadd.f32 0.0, %v2488
        %v2490 = vpop.f32.mrb[0].mxu0
        %2491 = vmatprep.mubr.bf16.mxu0 0
        %2492 = vmatmul.mubr.bf16.gmra.mrb[0].mxu0 %v2348
        %v2493 = vpop.f32.mrb[0].mxu0
        %v2494 = vadd.f32 0.0, %v2493
        %v2495 = vpop.f32.mrb[0].mxu0
        %v2496 = vpop.f32.mrb[0].mxu0
        %v2497 = vadd.f32 0.0, %v2496
        %v2498 = vpop.f32.mrb[0].mxu0
        %2499 = vmatprep.mubr.bf16.mxu0 0
        %2500 = vmatmul.mubr.bf16.gmra.mrb[0].mxu0 %v2351
        %v2501 = vpop.f32.mrb[0].mxu0
        %v2502 = vadd.f32 0.0, %v2501
        %v2503 = vpop.f32.mrb[0].mxu0
        %v2504 = vpop.f32.mrb[0].mxu0
        %v2505 = vadd.f32 0.0, %v2504
        %v2506 = vpop.f32.mrb[0].mxu0
        %2507 = vmatprep.mubr.bf16.mxu0 0
        %2508 = vmatmul.mubr.bf16.gmra.mrb[0].mxu0 %v2354
        %v2509 = vpop.f32.mrb[0].mxu0
        %v2510 = vadd.f32 0.0, %v2509
        %v2511 = vpop.f32.mrb[0].mxu0
        %v2512 = vpop.f32.mrb[0].mxu0
        %v2513 = vadd.f32 0.0, %v2512
        %v2514 = vpop.f32.mrb[0].mxu0
        %2515 = vmatprep.mubr.bf16.mxu0 0
        %2516 = vmatmul.mubr.bf16.gmra.mrb[0].mxu0 %v2357
        %v2517 = vpop.f32.mrb[0].mxu0
        %v2518 = vadd.f32 0.0, %v2517
        %v2519 = vpop.f32.mrb[0].mxu0
        %v2520 = vpop.f32.mrb[0].mxu0
        %v2521 = vadd.f32 0.0, %v2520
        %v2522 = vpop.f32.mrb[0].mxu0
        %2523 = vdwg.mxu0
        %2524 = vst [vmem:[%s167] sm:$0xff] %v2398
        %2525 = vst [vmem:[%s167 + $0x8] sm:$0xff] %v2401
        %2526 = vst [vmem:[%s167 + $0x10] sm:$0xff] %v2406
        %2527 = vst [vmem:[%s167 + $0x18] sm:$0xff] %v2409
        %2528 = vst [vmem:[%s167 + $0x20] sm:$0xff] %v2414
        %2529 = vst [vmem:[%s167 + $0x28] sm:$0xff] %v2417
        %2530 = vst [vmem:[%s167 + $0x30] sm:$0xff] %v2422
        %2531 = vst [vmem:[%s167 + $0x38] sm:$0xff] %v2425
        %2532 = vst [vmem:[%s167 + $0x40] sm:$0xff] %v2430
        %2533 = vst [vmem:[%s167 + $0x48] sm:$0xff] %v2433
        %2534 = vst [vmem:[%s167 + $0x50] sm:$0xff] %v2438
        %2535 = vst [vmem:[%s167 + $0x58] sm:$0xff] %v2441
        %2536 = vst [vmem:[%s167 + $0x60] sm:$0xff] %v2446
        %2537 = vst [vmem:[%s167 + $0x68] sm:$0xff] %v2449
        %2538 = vst [vmem:[%s167 + $0x70] sm:$0xff] %v2454
        %2539 = vst [vmem:[%s167 + $0x78] sm:$0xff] %v2457
        %2540 = vst [vmem:[%s167 + $0x80] sm:$0xff] %v2462
        %2541 = vst [vmem:[%s167 + $0x88] sm:$0xff] %v2465
        %2542 = vst [vmem:[%s167 + $0x90] sm:$0xff] %v2470
        %2543 = vst [vmem:[%s167 + $0x98] sm:$0xff] %v2473
        %2544 = vst [vmem:[%s167 + $0xa0] sm:$0xff] %v2478
        %2545 = vst [vmem:[%s167 + $0xa8] sm:$0xff] %v2481
        %2546 = vst [vmem:[%s167 + $0xb0] sm:$0xff] %v2486
        %2547 = vst [vmem:[%s167 + $0xb8] sm:$0xff] %v2489
        %2548 = vst [vmem:[%s167 + $0xc0] sm:$0xff] %v2494
        %2549 = vst [vmem:[%s167 + $0xc8] sm:$0xff] %v2497
        %2550 = vst [vmem:[%s167 + $0xd0] sm:$0xff] %v2502
        %2551 = vst [vmem:[%s167 + $0xd8] sm:$0xff] %v2505
        %2552 = vst [vmem:[%s167 + $0xe0] sm:$0xff] %v2510
        %2553 = vst [vmem:[%s167 + $0xe8] sm:$0xff] %v2513
        %2554 = vst [vmem:[%s167 + $0xf0] sm:$0xff] %v2518
        %2555 = vst [vmem:[%s167 + $0xf8] sm:$0xff] %v2521
        %v2556 = vadd.f32 %v2398, %v2401
        %v2557 = vadd.f32 %v2556, %v2406
        %v2558 = vadd.f32 %v2557, %v2409
        %v2559 = vadd.f32 %v2558, %v2414
        %v2560 = vadd.f32 %v2559, %v2417
        %v2561 = vadd.f32 %v2560, %v2422
        %v2562 = vadd.f32 %v2561, %v2425
        %v2563 = vadd.f32 %v2562, %v2430
        %v2564 = vadd.f32 %v2563, %v2433
        %v2565 = vadd.f32 %v2564, %v2438
        %v2566 = vadd.f32 %v2565, %v2441
        %v2567 = vadd.f32 %v2566, %v2446
        %v2568 = vadd.f32 %v2567, %v2449
        %v2569 = vadd.f32 %v2568, %v2454
        %v2570 = vadd.f32 %v2569, %v2457
        %v2571 = vadd.f32 %v2570, %v2462
        %v2572 = vadd.f32 %v2571, %v2465
        %v2573 = vadd.f32 %v2572, %v2470
        %v2574 = vadd.f32 %v2573, %v2473
        %v2575 = vadd.f32 %v2574, %v2478
        %v2576 = vadd.f32 %v2575, %v2481
        %v2577 = vadd.f32 %v2576, %v2486
        %v2578 = vadd.f32 %v2577, %v2489
        %v2579 = vadd.f32 %v2578, %v2494
        %v2580 = vadd.f32 %v2579, %v2497
        %v2581 = vadd.f32 %v2580, %v2502
        %v2582 = vadd.f32 %v2581, %v2505
        %v2583 = vadd.f32 %v2582, %v2510
        %v2584 = vadd.f32 %v2583, %v2513
        %v2585 = vadd.f32 %v2584, %v2518
        %v2586 = vadd.f32 %v2585, %v2521
        %v2587 = vrot.slane %v2586, 4
        %v2588 = vadd.f32 %v2586, %v2587
        %v2589 = vrot.slane %v2588, 2
        %v2590 = vadd.f32 %v2588, %v2589
        %v2591 = vrot.slane %v2590, 1
        %v2592 = vadd.f32 %v2590, %v2591
        %v2593 = vmul.f32 %v2398, %v2398
        %v2594 = vmul.f32 %v2401, %v2401
        %v2595 = vmul.f32 %v2406, %v2406
        %v2596 = vmul.f32 %v2409, %v2409
        %v2597 = vmul.f32 %v2414, %v2414
        %v2598 = vmul.f32 %v2417, %v2417
        %v2599 = vmul.f32 %v2422, %v2422
        %v2600 = vmul.f32 %v2425, %v2425
        %v2601 = vmul.f32 %v2430, %v2430
        %v2602 = vmul.f32 %v2433, %v2433
        %v2603 = vmul.f32 %v2438, %v2438
        %v2604 = vmul.f32 %v2441, %v2441
        %v2605 = vmul.f32 %v2446, %v2446
        %v2606 = vmul.f32 %v2449, %v2449
        %v2607 = vmul.f32 %v2454, %v2454
        %v2608 = vmul.f32 %v2457, %v2457
        %v2609 = vmul.f32 %v2462, %v2462
        %v2610 = vmul.f32 %v2465, %v2465
        %v2611 = vmul.f32 %v2470, %v2470
        %v2612 = vmul.f32 %v2473, %v2473
        %v2613 = vmul.f32 %v2478, %v2478
        %v2614 = vmul.f32 %v2481, %v2481
        %v2615 = vmul.f32 %v2486, %v2486
        %v2616 = vmul.f32 %v2489, %v2489
        %v2617 = vmul.f32 %v2494, %v2494
        %v2618 = vmul.f32 %v2497, %v2497
        %v2619 = vmul.f32 %v2502, %v2502
        %v2620 = vmul.f32 %v2505, %v2505
        %v2621 = vmul.f32 %v2510, %v2510
        %v2622 = vmul.f32 %v2513, %v2513
        %v2623 = vmul.f32 %v2518, %v2518
        %v2624 = vmul.f32 %v2521, %v2521
        %v2625 = vadd.f32 %v2593, %v2594
        %v2626 = vadd.f32 %v2625, %v2595
        %v2627 = vadd.f32 %v2626, %v2596
        %v2628 = vadd.f32 %v2627, %v2597
        %v2629 = vadd.f32 %v2628, %v2598
        %v2630 = vadd.f32 %v2629, %v2599
        %v2631 = vadd.f32 %v2630, %v2600
        %v2632 = vadd.f32 %v2631, %v2601
        %v2633 = vadd.f32 %v2632, %v2602
        %v2634 = vadd.f32 %v2633, %v2603
        %v2635 = vadd.f32 %v2634, %v2604
        %v2636 = vadd.f32 %v2635, %v2605
        %v2637 = vadd.f32 %v2636, %v2606
        %v2638 = vadd.f32 %v2637, %v2607
        %v2639 = vadd.f32 %v2638, %v2608
        %v2640 = vadd.f32 %v2639, %v2609
        %v2641 = vadd.f32 %v2640, %v2610
        %v2642 = vadd.f32 %v2641, %v2611
        %v2643 = vadd.f32 %v2642, %v2612
        %v2644 = vadd.f32 %v2643, %v2613
        %v2645 = vadd.f32 %v2644, %v2614
        %v2646 = vadd.f32 %v2645, %v2615
        %v2647 = vadd.f32 %v2646, %v2616
        %v2648 = vadd.f32 %v2647, %v2617
        %v2649 = vadd.f32 %v2648, %v2618
        %v2650 = vadd.f32 %v2649, %v2619
        %v2651 = vadd.f32 %v2650, %v2620
        %v2652 = vadd.f32 %v2651, %v2621
        %v2653 = vadd.f32 %v2652, %v2622
        %v2654 = vadd.f32 %v2653, %v2623
        %v2655 = vadd.f32 %v2654, %v2624
        %v2656 = vrot.slane %v2655, 4
        %v2657 = vadd.f32 %v2655, %v2656
        %v2658 = vrot.slane %v2657, 2
        %v2659 = vadd.f32 %v2657, %v2658
        %v2660 = vrot.slane %v2659, 1
        %v2661 = vadd.f32 %v2659, %v2660
        %vm2662 = vcmask 1040384
        %v2663 = vsel %vm2662, %v2592, %v2661
        %v2664 = vsel %vm2359, %v2663, 0.0
        %2665 = vst [vmem:[%s174] sm:$0xff] %v2664
        %s2666 = sand.u32 %s76, 1
        %s2667 = scalar_lea.sflag [#allocation3], %s2666
        %s2668 = sand.u32 %s76, 1
        %s2669 = smul.addr %s2668, 256
        %s2670 = scalar_lea.vmem [#allocation2], %s2669
        %s2671 = sand.u32 %s102, 1
        %s2672 = scalar_lea.sflag [#allocation5], %s2671
        %s2673 = sand.u32 %s102, 1
        %s2674 = smul.addr %s2673, 8
        %s2675 = scalar_lea.vmem [#allocation4], %s2674
        // Predicated region
        $region29: #{tpu_custom_call.1} parent=27 // pred_check
          %p2676 = pneg %p86
        $region30: #{tpu_custom_call.1} parent=27 // pred_check_branch
          %2678 = sbr.rel (%p2676) target = $region32
        $region31: #{tpu_custom_call.1} parent=27 // pred_region
          %s2679 = smul.u32 32, %s21
          %s2681 = ssub.s32 4096, 4096
          %2682 = vsyncadd %s2667, %s2681
          %s2683 = smul.addr %s2679, 128
          %s2684 = scalar_lea.hbm %s2, %s2683
          %s2685 = sshll.u32 %s2670, 4
          %s2686 = int_to_ptr.vmem [resolvable:$true] %s2685
          %2691 = dma.vmem_to_hbm [thread:$0]  %s2686, 4096, %s2684, %s2667, 128, 128, 8
        $region32: #{tpu_custom_call.1} parent=27 // pred_fallthru
          _
        // Predicated region
        $region33: #{tpu_custom_call.1} parent=27 // pred_check
          %p2692 = pneg %p112
        $region34: #{tpu_custom_call.1} parent=27 // pred_check_branch
          %2694 = sbr.rel (%p2692) target = $region36
        $region35: #{tpu_custom_call.1} parent=27 // pred_region
          %s2696 = ssub.s32 128, 128
          %2697 = vsyncadd %s2672, %s2696
          %s2698 = smul.addr %s21, 128
          %s2699 = scalar_lea.hbm %s3, %s2698
          %s2701 = sshll.u32 %s2675, 4
          %s2702 = int_to_ptr.vmem [resolvable:$true] %s2701
          %2704 = dma.vmem_to_hbm [thread:$0]  %s2702, 128, %s2699, %s2672
        $region36: #{tpu_custom_call.1} parent=27 // pred_fallthru
          _
      $region28: #{tpu_custom_call.1} parent=5 // pred_fallthru
        _
      %p2705 = scmp.le.s32.totalorder 2, %s16
      // Predicated region
      $region37: #{tpu_custom_call.1} parent=5 // pred_check
        %p2706 = pneg %p2705
      $region38: #{tpu_custom_call.1} parent=5 // pred_check_branch
        %2708 = sbr.rel (%p2706) target = $region40
      $region39: #{tpu_custom_call.1} parent=5 // pred_region
        %s2709 = ssub.s32 %s16, 2
        // Predicated region
        $region41: #{tpu_custom_call.1} parent=39 // pred_check
          %p2710 = pneg %p92
        $region42: #{tpu_custom_call.1} parent=39 // pred_check_branch
          %2712 = sbr.rel (%p2710) target = $region44
        $region43: #{tpu_custom_call.1} parent=39 // pred_region
          %s2713 = sand.u32 %s77, 1
          %s2714 = scalar_lea.sflag [#allocation3], %s2713
          %s2715 = sand.u32 %s77, 1
          %s2716 = smul.addr %s2715, 256
          %s2717 = scalar_lea.vmem [#allocation2], %s2716
          %2718 = dma.done %s2714, 4096
        $region44: #{tpu_custom_call.1} parent=39 // pred_fallthru
          _
        // Predicated region
        $region45: #{tpu_custom_call.1} parent=39 // pred_check
          %p2719 = pneg %p118
        $region46: #{tpu_custom_call.1} parent=39 // pred_check_branch
          %2721 = sbr.rel (%p2719) target = $region48
        $region47: #{tpu_custom_call.1} parent=39 // pred_region
          %s2722 = sand.u32 %s103, 1
          %s2723 = scalar_lea.sflag [#allocation5], %s2722
          %s2724 = sand.u32 %s103, 1
          %s2725 = smul.addr %s2724, 8
          %s2726 = scalar_lea.vmem [#allocation4], %s2725
          %2727 = dma.done %s2723, 128
        $region48: #{tpu_custom_call.1} parent=39 // pred_fallthru
          _
      $region40: #{tpu_custom_call.1} parent=5 // pred_fallthru
        _
    $region6: #{tpu_custom_call.1} parent=1 // loop_footer
      %s20 = sadd.s32 1, %s16
    $region7: #{tpu_custom_call.1} parent=1 // loop_footer_branch
      %15 = sbr.rel target = $region3
    $region8: #{tpu_custom_call.1} parent=1 // loop_exit
      _
    %2728 = vsyncpa [#allocation3], 1
    %s2729 = scalar_lea.sflag [#allocation3], 1
    %2730 = vsyncpa %s2729, 1
    %2731 = vsyncpa [#allocation5], 1
    %s2732 = scalar_lea.sflag [#allocation5], 1
    %2733 = vsyncpa %s2732, 1

</llo_original>
